<compile_context>
chip_gen: v7x
topology: tpu7x:2x2x1
jax: 0.10.0
libtpu: 0.0.40
codegen_flags: <defaults>
</compile_context>

<pallas_src>
import math
import numpy as np
import jax
import jax.numpy as jnp
from jax.experimental import pallas as pl
from jax.experimental.pallas import tpu as pltpu

# ----------------------------- model dimensions ------------------------------
STATE_SIZE = 3          # must be 3 (scale_ref broadcasting)
MULTI_HEAD = 2
SEQ_INP_1 = 8
SEQ_INP_2 = 8
SEQ_MID = 32
SEQ_OUP = 16
L = SEQ_OUP - 1         # encoder output / decoder working sequence length (15)
NUM_STEP = 2
EPS = 1e-6

N_ROWS_X = STATE_SIZE * (1 + NUM_STEP)      # 9  (enc1 rows + enc2 rows per step)
N_ROWS_E2 = STATE_SIZE * NUM_STEP           # 6
HM = MULTI_HEAD * L                         # 30 (head-concatenated width)


# ------------------------------ host-side packing ----------------------------
def _block_diag(blocks):
    blocks = [np.asarray(b, np.float32) for b in blocks]
    rows = sum(b.shape[0] for b in blocks)
    cols = sum(b.shape[1] for b in blocks)
    out = np.zeros((rows, cols), np.float32)
    r = c = 0
    for b in blocks:
        out[r:r + b.shape[0], c:c + b.shape[1]] = b
        r += b.shape[0]
        c += b.shape[1]
    return out


def _pack_slab(entries, width):
    """Stack 2-D arrays into one [R, width] slab; 8-row-aligned, col offset 0."""
    offs = {}
    blocks = []
    r = 0
    for name, a in entries:
        a = np.asarray(a, np.float32)
        h, w = a.shape
        assert w <= width, (name, a.shape, width)
        pad_r = (-h) % 8
        blk = np.zeros((h + pad_r, width), np.float32)
        blk[:h, :w] = a
        blocks.append(blk)
        offs[name] = (r, h, w)
        r += h + pad_r
    return np.concatenate(blocks, axis=0), offs


def pack_weights(params):
    p1 = {k: np.asarray(v, np.float32) for k, v in params["enc1"].items()}
    p2 = {k: np.asarray(v, np.float32) for k, v in params["enc2"].items()}
    pd = {k: np.asarray(v, np.float32) for k, v in params["dec"].items()}

    # --- encoders fused: block-diag weights (enc1 block first, enc2 second) ---
    w_blk = {n: _block_diag([p1[n], p2[n]]) for n in ("w1", "w2", "w3", "w4", "w5", "w6")}
    gamma = np.concatenate(
        [np.broadcast_to(p1["ln_w"].reshape(1, L), (STATE_SIZE, L)),
         np.broadcast_to(p2["ln_w"].reshape(1, L), (N_ROWS_E2, L))], axis=0)
    beta = np.concatenate(
        [np.broadcast_to(p1["ln_b"].reshape(1, L), (STATE_SIZE, L)),
         np.broadcast_to(p2["ln_b"].reshape(1, L), (N_ROWS_E2, L))], axis=0)

    # --- fused q/k/v projection: rows = [q | k_s ... | v_s ...], cols = enc rows
    wq = pd["w_qkv_1"][0]
    wk = pd["w_qkv_2"][1]
    wv = pd["w_qkv_2"][2]
    w_qkv = np.zeros((STATE_SIZE * (1 + 2 * NUM_STEP), N_ROWS_X), np.float32)
    w_qkv[0:3, 0:3] = wq
    for s in range(NUM_STEP):
        w_qkv[3 + 3 * s:6 + 3 * s, 3 + 3 * s:6 + 3 * s] = wk
        w_qkv[3 + 3 * NUM_STEP + 3 * s:6 + 3 * NUM_STEP + 3 * s, 3 + 3 * s:6 + 3 * s] = wv

    # --- per-head MLPs, fused over (j, head): wa concat, wb block-diag --------
    wa, wb = pd["wa"], pd["wb"]                                   # [H,3,L,M], [H,3,M,L]
    wa_all = np.concatenate(
        [np.concatenate([wa[h, j] for h in range(MULTI_HEAD)], axis=1)
         for j in range(3)], axis=1)                              # [L, 3*H*M] = [15, 192]
    wb_big = _block_diag(
        [_block_diag([wb[h, j] for h in range(MULTI_HEAD)]) for j in range(3)])  # [192, 90]

    wc1T = pd["wc1"].T                                            # [M, H*S] = [32, 6]
    wc2T = pd["wc2"].T                                            # [S, M]  = [3, 32]
    wl1_big = _block_diag([pd["wl1"]] * NUM_STEP)                 # [NS*L, NS*M]
    wl2_big = _block_diag([pd["wl2"]] * NUM_STEP)                 # [NS*M, NS*L]
    tri_sub = np.asarray(params["tri"], np.float32)[1:, :]        # [L, SEQ_OUP]
    tri_big = _block_diag([tri_sub] * NUM_STEP)                   # [NS*L, NS*SEQ_OUP]
    scale = np.asarray(params["scale_ref"], np.float32)           # [3, 1]
    start_dis = np.asarray(params["start_dis"], np.float32)       # [3, 1]

    slab_a, offs_a = _pack_slab(
        [("enc_w1", w_blk["w1"]), ("enc_w2", w_blk["w2"]), ("enc_w3", w_blk["w3"]),
         ("enc_w4", w_blk["w4"]), ("enc_w5", w_blk["w5"]), ("enc_w6", w_blk["w6"]),
         ("ln_g", gamma), ("ln_b", beta), ("w_qkv", w_qkv),
         ("wc1T", wc1T), ("wc2T", wc2T),
         ("wl1", wl1_big), ("wl2", wl2_big), ("tri", tri_big),
         ("scale", scale), ("start_dis", start_dis)],
        width=64)
    slab_b, offs_b = _pack_slab(
        [("wa", wa_all), ("wb", wb_big)],
        width=3 * MULTI_HEAD * SEQ_MID)                           # 192

    return jnp.asarray(slab_a), offs_a, jnp.asarray(slab_b), offs_b


# ------------------------------- fused kernel --------------------------------
def make_forward(offs_a, offs_b):
    x_cols = SEQ_INP_1 + SEQ_INP_2
    out_cols = NUM_STEP * SEQ_OUP

    def kernel(x_ref, sa_ref, sb_ref, o_ref):
        f32 = jnp.float32

        def A(name):
            r, h, w = offs_a[name]
            return sa_ref[r:r + h, 0:w]

        def B(name):
            r, h, w = offs_b[name]
            return sb_ref[r:r + h, 0:w]

        def mm(a, b):
            return jnp.dot(a, b, preferred_element_type=f32)

        def relu(t):
            return jnp.maximum(t, 0.0)

        # ---------------- batched encoders (enc1 + NUM_STEP x enc2) ----------
        x = x_ref[...]                                   # [9, 16] block-diag raw input
        h = jnp.tanh(x)
        h = relu(mm(h, A("enc_w1")))
        h = relu(mm(h, A("enc_w2")))
        lin1 = mm(h, A("enc_w3"))                        # [9, 2L] block structured
        t = jnp.tanh(lin1)
        t = relu(mm(t, A("enc_w4")))
        t = relu(mm(t, A("enc_w5")))
        lin2 = mm(t, A("enc_w6"))
        s = lin1 + lin2
        s = s[:, 0:L] + s[:, L:2 * L]                    # merge disjoint lane blocks -> [9, L]
        mu = jnp.mean(s, axis=-1, keepdims=True)
        var = jnp.mean((s - mu) ** 2, axis=-1, keepdims=True)   # biased (torch LN)
        enc = (s - mu) * jax.lax.rsqrt(var + EPS) * A("ln_g") + A("ln_b")   # [9, L]

        # ---------------- q/k/v projections for all steps: one dot -----------
        qkv = relu(mm(A("w_qkv"), enc))                  # [15, L]  rows: q | k_s | v_s
        # ---------------- per-head MLPs (all j/heads/steps): two dots ---------
        t1 = relu(mm(qkv, B("wa")))                      # [15, 3*H*M]
        s_all = mm(t1, B("wb"))                          # [15, 3*H*L]

        # ---------------- attention heads: head = (s2 s1^T) s0 on VPU/XLU -----
        heads = []
        for hh in range(MULTI_HEAD):
            s0 = s_all[0:STATE_SIZE, hh * L:(hh + 1) * L]               # [3, L] (q branch)
            per_step = []
            for st in range(NUM_STEP):
                rk = STATE_SIZE * (1 + st)
                rv = STATE_SIZE * (1 + NUM_STEP + st)
                s1 = s_all[rk:rk + STATE_SIZE, HM + hh * L:HM + (hh + 1) * L]
                s2 = s_all[rv:rv + STATE_SIZE, 2 * HM + hh * L:2 * HM + (hh + 1) * L]
                acc = None
                for j in range(STATE_SIZE):
                    g_j = jnp.sum(s2 * s1[j:j + 1, :], axis=-1, keepdims=True)  # [3,1]
                    term = g_j * s0[j:j + 1, :]
                    acc = term if acc is None else acc + term
                per_step.append(acc)                                    # [3, L]
            heads.append(jnp.concatenate(per_step, axis=1))             # [3, NS*L]
        cat = jnp.concatenate(heads, axis=0)                            # [H*3, NS*L]

        # ---------------- concat layers (steps batched along lanes) ----------
        u = relu(mm(A("wc1T"), jnp.tanh(cat)))            # [M, NS*L]
        att = mm(A("wc2T"), u)                            # [3, NS*L]

        # ---------------- final linear layers (block-diag over steps) --------
        y = jnp.tanh(att)
        y = relu(mm(y, A("wl1")))                         # [3, NS*M]
        dec = jnp.tanh(mm(y, A("wl2")))                   # [3, NS*L]

        # ---------------- cumsum via tri + serial anchor carry ----------------
        cs = mm(dec, A("tri")) + A("start_dis")           # [3, NS*SEQ_OUP]
        scale = A("scale")                                # [3, 1]
        start = x_ref[0:STATE_SIZE, 0:1]                  # inp1[:, 0] (raw)
        offsets = []
        for st in range(NUM_STEP):
            offsets.append(jnp.broadcast_to(start, (STATE_SIZE, SEQ_OUP)))
            last = cs[:, (st + 1) * SEQ_OUP - 1:(st + 1) * SEQ_OUP]
            start = start + scale * last
        o_ref[...] = cs * scale + jnp.concatenate(offsets, axis=1)

    def forward(slab_a, slab_b, inp1, inp2):
        # block-diagonal input packing: rows 0:3 = inp1 (cols 0:8),
        # rows 3:9 = inp2 steps (cols 8:16)
        x_blk = jnp.zeros((N_ROWS_X, x_cols), jnp.float32)
        x_blk = x_blk.at[0:STATE_SIZE, 0:SEQ_INP_1].set(inp1[0])
        x_blk = x_blk.at[STATE_SIZE:, SEQ_INP_1:].set(
            inp2.reshape(STATE_SIZE * NUM_STEP, SEQ_INP_2))

        out = pl.pallas_call(
            kernel,
            out_shape=jax.ShapeDtypeStruct((STATE_SIZE, out_cols), jnp.float32),
            grid=(1,),
            in_specs=[
                pl.BlockSpec((N_ROWS_X, x_cols), lambda i: (0, 0)),
                pl.BlockSpec(slab_a.shape, lambda i: (0, 0)),
                pl.BlockSpec(slab_b.shape, lambda i: (0, 0)),
            ],
            out_specs=pl.BlockSpec((STATE_SIZE, out_cols), lambda i: (0, 0)),
            compiler_params=pltpu.CompilerParams(
                dimension_semantics=("arbitrary",),
                vmem_limit_bytes=16 * 1024 * 1024,
            ),
        )(x_blk, slab_a, slab_b)
        # lane-contiguous [3, NS*16] -> [NS, 3, 16]
        return out.reshape(STATE_SIZE, NUM_STEP, SEQ_OUP).transpose(1, 0, 2)

    return forward


# ------------------------------ parameter init -------------------------------
def init_encoder(key, n_in):
    ks = jax.random.split(key, 6)
    std = 0.1
    return dict(
        w1=std * jax.random.normal(ks[0], (n_in, SEQ_MID), jnp.float32),
        w2=std * jax.random.normal(ks[1], (SEQ_MID, SEQ_MID), jnp.float32),
        w3=std * jax.random.normal(ks[2], (SEQ_MID, L), jnp.float32),
        w4=std * jax.random.normal(ks[3], (L, SEQ_MID), jnp.float32),
        w5=std * jax.random.normal(ks[4], (SEQ_MID, SEQ_MID), jnp.float32),
        w6=std * jax.random.normal(ks[5], (SEQ_MID, L), jnp.float32),
        ln_w=jnp.ones((1, L), jnp.float32),
        ln_b=jnp.zeros((1, L), jnp.float32),
    )


def init_decoder(key):
    ks = jax.random.split(key, 8)
    std = 0.1
    return dict(
        w_qkv_1=2.0 * jax.random.normal(ks[0], (3, STATE_SIZE, STATE_SIZE), jnp.float32),
        w_qkv_2=2.0 * jax.random.normal(ks[1], (3, STATE_SIZE, STATE_SIZE), jnp.float32),
        wa=std * jax.random.normal(ks[2], (MULTI_HEAD, 3, L, SEQ_MID), jnp.float32),
        wb=std * jax.random.normal(ks[3], (MULTI_HEAD, 3, SEQ_MID, L), jnp.float32),
        wc1=std * jax.random.normal(ks[4], (STATE_SIZE * MULTI_HEAD, SEQ_MID), jnp.float32),
        wc2=std * jax.random.normal(ks[5], (SEQ_MID, STATE_SIZE), jnp.float32),
        wl1=std * jax.random.normal(ks[6], (L, SEQ_MID), jnp.float32),
        wl2=std * jax.random.normal(ks[7], (SEQ_MID, L), jnp.float32),
    )


# ------------------------ pure-JAX reference (for check) ----------------------
def _ref_encoder(x, p, P):
    h = jnp.tanh(x)
    h = jnp.maximum(jnp.dot(h, p["w1"], precision=P), 0.0)
    h = jnp.maximum(jnp.dot(h, p["w2"], precision=P), 0.0)
    lin1 = jnp.dot(h, p["w3"], precision=P)
    g = jnp.tanh(lin1)
    g = jnp.maximum(jnp.dot(g, p["w4"], precision=P), 0.0)
    g = jnp.maximum(jnp.dot(g, p["w5"], precision=P), 0.0)
    lin2 = jnp.dot(g, p["w6"], precision=P)
    s = lin1 + lin2
    mu = jnp.mean(s, -1, keepdims=True)
    var = jnp.mean((s - mu) ** 2, -1, keepdims=True)
    return (s - mu) * jax.lax.rsqrt(var + EPS) * p["ln_w"] + p["ln_b"]


def _ref_decoder(e1, e2, p, P):
    q = jnp.matmul(p["w_qkv_1"][0], e1, precision=P)
    k = jnp.matmul(p["w_qkv_2"][1], e2, precision=P)
    v = jnp.matmul(p["w_qkv_2"][2], e2, precision=P)
    qkv = (q, k, v)
    heads = []
    for h in range(MULTI_HEAD):
        sc = []
        for j in range(3):
            t = jnp.maximum(qkv[j], 0.0)
            t = jnp.maximum(jnp.dot(t, p["wa"][h, j], precision=P), 0.0)
            sc.append(jnp.dot(t, p["wb"][h, j], precision=P))
        kq = jnp.dot(sc[1].T, sc[0], precision=P)
        heads.append(jnp.dot(sc[2], kq, precision=P))
    cat = jnp.concatenate(heads, axis=0)
    x = jnp.tanh(cat.T)
    x = jnp.maximum(jnp.dot(x, p["wc1"], precision=P), 0.0)
    x = jnp.dot(x, p["wc2"], precision=P)
    att = x.T
    y = jnp.tanh(att)
    y = jnp.maximum(jnp.dot(y, p["wl1"], precision=P), 0.0)
    return jnp.tanh(jnp.dot(y, p["wl2"], precision=P))


def _ref_pre_anchors(params, inp1, inp2):
    P = jax.lax.Precision.HIGHEST
    e1 = _ref_encoder(inp1[0], params["enc1"], P)
    anchors = []
    start = inp1[0, :, 0:1]
    for step in range(NUM_STEP):
        e2 = _ref_encoder(inp2[step], params["enc2"], P)
        d = _ref_decoder(e1, e2, params["dec"], P)
        oup = jnp.concatenate([params["start_dis"], d], axis=1)
        cs = jnp.cumsum(oup, axis=-1)
        anch = cs * params["scale_ref"] + start
        anchors.append(anch[None])
        start = anch[:, -1:]
    return jnp.concatenate(anchors, axis=0)


# ------------------------------------ main ------------------------------------
if __name__ == "__main__":
    key = jax.random.PRNGKey(0)
    k_params, k_in1, k_in2 = jax.random.split(key, 3)
    k_enc1, k_enc2, k_dec = jax.random.split(k_params, 3)

    params = dict(
        enc1=init_encoder(k_enc1, SEQ_INP_1),
        enc2=init_encoder(k_enc2, SEQ_INP_2),
        dec=init_decoder(k_dec),
        # paras['limits'] chosen as [[-5, 5], [-3, 3]] -> scale = [x_hi, y_hi, pi/2]^T
        scale_ref=jnp.array([[5.0], [3.0], [math.pi / 2]], jnp.float32),
        start_dis=jnp.zeros((STATE_SIZE, 1), jnp.float32),
        # upper-triangular ones -> cumsum along the sequence axis via matmul
        tri=jnp.triu(jnp.ones((SEQ_OUP, SEQ_OUP), jnp.float32)),
    )

    slab_a, offs_a, slab_b, offs_b = pack_weights(params)

    inp1 = jax.random.normal(k_in1, (1, STATE_SIZE, SEQ_INP_1), jnp.float32)
    inp2 = jax.random.normal(k_in2, (NUM_STEP, STATE_SIZE, SEQ_INP_2), jnp.float32)

    forward = jax.jit(make_forward(offs_a, offs_b))
    anchors = jax.block_until_ready(forward(slab_a, slab_b, inp1, inp2))

    assert anchors.shape == (NUM_STEP, STATE_SIZE, SEQ_OUP), anchors.shape
    assert bool(jnp.all(jnp.isfinite(anchors)))

    ref = jax.block_until_ready(jax.jit(_ref_pre_anchors)(params, inp1, inp2))
    err = float(jnp.max(jnp.abs(anchors - ref)))
    assert err < 5e-2, f"max abs diff vs reference = {err}"

    print("KERNEL_OK")
</pallas_src>

<mosaic_0001>
module attributes {stable_mosaic.version = 11 : i64} {
  func.func @kernel(%arg0: i32, %arg1: memref<9x16xf32, #tpu.memory_space<vmem>>, %arg2: memref<536x64xf32, #tpu.memory_space<vmem>>, %arg3: memref<208x192xf32, #tpu.memory_space<vmem>>, %arg4: memref<3x32xf32, #tpu.memory_space<vmem>>) attributes {dimension_semantics = [#tpu.dimension_semantics<arbitrary>], iteration_bounds = array<i64: 1>, scalar_prefetch = 0 : i64, scratch_operands = 0 : i64, tpu.core_type = #tpu.core_type<tc>, window_params = [{pipeline_mode = #tpu.pipeline_mode<synchronous>, transform_indices = @transform_0, window_bounds = array<i64: 9, 16>}, {pipeline_mode = #tpu.pipeline_mode<synchronous>, transform_indices = @transform_1, window_bounds = array<i64: 536, 64>}, {pipeline_mode = #tpu.pipeline_mode<synchronous>, transform_indices = @transform_2, window_bounds = array<i64: 208, 192>}, {pipeline_mode = #tpu.pipeline_mode<synchronous>, transform_indices = @transform_3, window_bounds = array<i64: 3, 32>}]} {
    %c0 = arith.constant 0 : index
    %c0_0 = arith.constant 0 : index
    %0 = vector.load %arg1[%c0, %c0_0] : memref<9x16xf32, #tpu.memory_space<vmem>>, vector<9x16xf32>
    %1 = math.tanh %0 : vector<9x16xf32>
    %c0_1 = arith.constant 0 : index
    %c0_2 = arith.constant 0 : index
    %2 = vector.load %arg2[%c0_1, %c0_2] : memref<536x64xf32, #tpu.memory_space<vmem>>, vector<16x64xf32>
    %cst = arith.constant dense<0.000000e+00> : vector<9x64xf32>
    %3 = tpu.matmul %1, %2, %cst {dimension_numbers = #tpu.dot_dimension_numbers<[1], [0], [0], [1], [0, 0, 1, 1], [], []>} : vector<9x16xf32>, vector<16x64xf32>, vector<9x64xf32> -> vector<9x64xf32>
    %cst_3 = arith.constant 0.000000e+00 : f32
    %4 = vector.broadcast %cst_3 : f32 to vector<9x64xf32>
    %5 = arith.maximumf %3, %4 : vector<9x64xf32>
    %c16 = arith.constant 16 : index
    %c0_4 = arith.constant 0 : index
    %6 = vector.load %arg2[%c16, %c0_4] : memref<536x64xf32, #tpu.memory_space<vmem>>, vector<64x64xf32>
    %cst_5 = arith.constant dense<0.000000e+00> : vector<9x64xf32>
    %7 = tpu.matmul %5, %6, %cst_5 {dimension_numbers = #tpu.dot_dimension_numbers<[1], [0], [0], [1], [0, 0, 1, 1], [], []>} : vector<9x64xf32>, vector<64x64xf32>, vector<9x64xf32> -> vector<9x64xf32>
    %cst_6 = arith.constant 0.000000e+00 : f32
    %8 = vector.broadcast %cst_6 : f32 to vector<9x64xf32>
    %9 = arith.maximumf %7, %8 : vector<9x64xf32>
    %c80 = arith.constant 80 : index
    %c0_7 = arith.constant 0 : index
    %10 = vector.load %arg2[%c80, %c0_7] : memref<536x64xf32, #tpu.memory_space<vmem>>, vector<64x30xf32>
    %cst_8 = arith.constant dense<0.000000e+00> : vector<9x30xf32>
    %11 = tpu.matmul %9, %10, %cst_8 {dimension_numbers = #tpu.dot_dimension_numbers<[1], [0], [0], [1], [0, 0, 1, 1], [], []>} : vector<9x64xf32>, vector<64x30xf32>, vector<9x30xf32> -> vector<9x30xf32>
    %12 = math.tanh %11 : vector<9x30xf32>
    %c144 = arith.constant 144 : index
    %c0_9 = arith.constant 0 : index
    %13 = vector.load %arg2[%c144, %c0_9] : memref<536x64xf32, #tpu.memory_space<vmem>>, vector<30x64xf32>
    %cst_10 = arith.constant dense<0.000000e+00> : vector<9x64xf32>
    %14 = tpu.matmul %12, %13, %cst_10 {dimension_numbers = #tpu.dot_dimension_numbers<[1], [0], [0], [1], [0, 0, 1, 1], [], []>} : vector<9x30xf32>, vector<30x64xf32>, vector<9x64xf32> -> vector<9x64xf32>
    %cst_11 = arith.constant 0.000000e+00 : f32
    %15 = vector.broadcast %cst_11 : f32 to vector<9x64xf32>
    %16 = arith.maximumf %14, %15 : vector<9x64xf32>
    %c176 = arith.constant 176 : index
    %c0_12 = arith.constant 0 : index
    %17 = vector.load %arg2[%c176, %c0_12] : memref<536x64xf32, #tpu.memory_space<vmem>>, vector<64x64xf32>
    %cst_13 = arith.constant dense<0.000000e+00> : vector<9x64xf32>
    %18 = tpu.matmul %16, %17, %cst_13 {dimension_numbers = #tpu.dot_dimension_numbers<[1], [0], [0], [1], [0, 0, 1, 1], [], []>} : vector<9x64xf32>, vector<64x64xf32>, vector<9x64xf32> -> vector<9x64xf32>
    %cst_14 = arith.constant 0.000000e+00 : f32
    %19 = vector.broadcast %cst_14 : f32 to vector<9x64xf32>
    %20 = arith.maximumf %18, %19 : vector<9x64xf32>
    %c240 = arith.constant 240 : index
    %c0_15 = arith.constant 0 : index
    %21 = vector.load %arg2[%c240, %c0_15] : memref<536x64xf32, #tpu.memory_space<vmem>>, vector<64x30xf32>
    %cst_16 = arith.constant dense<0.000000e+00> : vector<9x30xf32>
    %22 = tpu.matmul %20, %21, %cst_16 {dimension_numbers = #tpu.dot_dimension_numbers<[1], [0], [0], [1], [0, 0, 1, 1], [], []>} : vector<9x64xf32>, vector<64x30xf32>, vector<9x30xf32> -> vector<9x30xf32>
    %23 = arith.addf %11, %22 : vector<9x30xf32>
    %24 = vector.extract_strided_slice %23 {offsets = [0, 0], sizes = [9, 15], strides = [1, 1]} : vector<9x30xf32> to vector<9x15xf32>
    %25 = vector.extract_strided_slice %23 {offsets = [0, 15], sizes = [9, 15], strides = [1, 1]} : vector<9x30xf32> to vector<9x15xf32>
    %26 = arith.addf %24, %25 : vector<9x15xf32>
    %cst_17 = arith.constant dense<0.000000e+00> : vector<9xf32>
    %27 = vector.multi_reduction <add>, %26, %cst_17 [1] : vector<9x15xf32> to vector<9xf32>
    %28 = vector.shape_cast %27 : vector<9xf32> to vector<9x1xf32>
    %cst_18 = arith.constant 1.500000e+01 : f32
    %29 = vector.broadcast %cst_18 : f32 to vector<9x1xf32>
    %30 = arith.divf %28, %29 : vector<9x1xf32>
    %31 = vector.broadcast %30 : vector<9x1xf32> to vector<9x15xf32>
    %32 = arith.subf %26, %31 : vector<9x15xf32>
    %33 = arith.mulf %32, %32 : vector<9x15xf32>
    %cst_19 = arith.constant dense<0.000000e+00> : vector<9xf32>
    %34 = vector.multi_reduction <add>, %33, %cst_19 [1] : vector<9x15xf32> to vector<9xf32>
    %35 = vector.shape_cast %34 : vector<9xf32> to vector<9x1xf32>
    %cst_20 = arith.constant 1.500000e+01 : f32
    %36 = vector.broadcast %cst_20 : f32 to vector<9x1xf32>
    %37 = arith.divf %35, %36 : vector<9x1xf32>
    %38 = vector.broadcast %30 : vector<9x1xf32> to vector<9x15xf32>
    %39 = arith.subf %26, %38 : vector<9x15xf32>
    %cst_21 = arith.constant 9.99999997E-7 : f32
    %40 = vector.broadcast %cst_21 : f32 to vector<9x1xf32>
    %41 = arith.addf %37, %40 : vector<9x1xf32>
    %42 = math.rsqrt %41 : vector<9x1xf32>
    %43 = vector.broadcast %42 : vector<9x1xf32> to vector<9x15xf32>
    %44 = arith.mulf %39, %43 : vector<9x15xf32>
    %c304 = arith.constant 304 : index
    %c0_22 = arith.constant 0 : index
    %45 = vector.load %arg2[%c304, %c0_22] : memref<536x64xf32, #tpu.memory_space<vmem>>, vector<9x15xf32>
    %46 = arith.mulf %44, %45 : vector<9x15xf32>
    %c320 = arith.constant 320 : index
    %c0_23 = arith.constant 0 : index
    %47 = vector.load %arg2[%c320, %c0_23] : memref<536x64xf32, #tpu.memory_space<vmem>>, vector<9x15xf32>
    %48 = arith.addf %46, %47 : vector<9x15xf32>
    %c336 = arith.constant 336 : index
    %c0_24 = arith.constant 0 : index
    %49 = vector.load %arg2[%c336, %c0_24] : memref<536x64xf32, #tpu.memory_space<vmem>>, vector<15x9xf32>
    %cst_25 = arith.constant dense<0.000000e+00> : vector<15x15xf32>
    %50 = tpu.matmul %49, %48, %cst_25 {dimension_numbers = #tpu.dot_dimension_numbers<[1], [0], [0], [1], [0, 0, 1, 1], [], []>} : vector<15x9xf32>, vector<9x15xf32>, vector<15x15xf32> -> vector<15x15xf32>
    %cst_26 = arith.constant 0.000000e+00 : f32
    %51 = vector.broadcast %cst_26 : f32 to vector<15x15xf32>
    %52 = arith.maximumf %50, %51 : vector<15x15xf32>
    %c0_27 = arith.constant 0 : index
    %c0_28 = arith.constant 0 : index
    %53 = vector.load %arg3[%c0_27, %c0_28] : memref<208x192xf32, #tpu.memory_space<vmem>>, vector<15x192xf32>
    %cst_29 = arith.constant dense<0.000000e+00> : vector<15x192xf32>
    %54 = tpu.matmul %52, %53, %cst_29 {dimension_numbers = #tpu.dot_dimension_numbers<[1], [0], [0], [1], [0, 0, 1, 1], [], []>} : vector<15x15xf32>, vector<15x192xf32>, vector<15x192xf32> -> vector<15x192xf32>
    %cst_30 = arith.constant 0.000000e+00 : f32
    %55 = vector.broadcast %cst_30 : f32 to vector<15x192xf32>
    %56 = arith.maximumf %54, %55 : vector<15x192xf32>
    %c16_31 = arith.constant 16 : index
    %c0_32 = arith.constant 0 : index
    %57 = vector.load %arg3[%c16_31, %c0_32] : memref<208x192xf32, #tpu.memory_space<vmem>>, vector<192x90xf32>
    %cst_33 = arith.constant dense<0.000000e+00> : vector<15x90xf32>
    %58 = tpu.matmul %56, %57, %cst_33 {dimension_numbers = #tpu.dot_dimension_numbers<[1], [0], [0], [1], [0, 0, 1, 1], [], []>} : vector<15x192xf32>, vector<192x90xf32>, vector<15x90xf32> -> vector<15x90xf32>
    %59 = vector.extract_strided_slice %58 {offsets = [0, 0], sizes = [3, 15], strides = [1, 1]} : vector<15x90xf32> to vector<3x15xf32>
    %60 = vector.extract_strided_slice %58 {offsets = [3, 30], sizes = [3, 15], strides = [1, 1]} : vector<15x90xf32> to vector<3x15xf32>
    %61 = vector.extract_strided_slice %58 {offsets = [9, 60], sizes = [3, 15], strides = [1, 1]} : vector<15x90xf32> to vector<3x15xf32>
    %62 = vector.extract_strided_slice %60 {offsets = [0, 0], sizes = [1, 15], strides = [1, 1]} : vector<3x15xf32> to vector<1x15xf32>
    %63 = vector.broadcast %62 : vector<1x15xf32> to vector<3x15xf32>
    %64 = arith.mulf %61, %63 : vector<3x15xf32>
    %cst_34 = arith.constant dense<0.000000e+00> : vector<3xf32>
    %65 = vector.multi_reduction <add>, %64, %cst_34 [1] : vector<3x15xf32> to vector<3xf32>
    %66 = vector.shape_cast %65 : vector<3xf32> to vector<3x1xf32>
    %67 = vector.extract_strided_slice %59 {offsets = [0, 0], sizes = [1, 15], strides = [1, 1]} : vector<3x15xf32> to vector<1x15xf32>
    %68 = vector.broadcast %66 : vector<3x1xf32> to vector<3x15xf32>
    %69 = vector.broadcast %67 : vector<1x15xf32> to vector<3x15xf32>
    %70 = arith.mulf %68, %69 : vector<3x15xf32>
    %71 = vector.extract_strided_slice %60 {offsets = [1, 0], sizes = [1, 15], strides = [1, 1]} : vector<3x15xf32> to vector<1x15xf32>
    %72 = vector.broadcast %71 : vector<1x15xf32> to vector<3x15xf32>
    %73 = arith.mulf %61, %72 : vector<3x15xf32>
    %cst_35 = arith.constant dense<0.000000e+00> : vector<3xf32>
    %74 = vector.multi_reduction <add>, %73, %cst_35 [1] : vector<3x15xf32> to vector<3xf32>
    %75 = vector.shape_cast %74 : vector<3xf32> to vector<3x1xf32>
    %76 = vector.extract_strided_slice %59 {offsets = [1, 0], sizes = [1, 15], strides = [1, 1]} : vector<3x15xf32> to vector<1x15xf32>
    %77 = vector.broadcast %75 : vector<3x1xf32> to vector<3x15xf32>
    %78 = vector.broadcast %76 : vector<1x15xf32> to vector<3x15xf32>
    %79 = arith.mulf %77, %78 : vector<3x15xf32>
    %80 = arith.addf %70, %79 : vector<3x15xf32>
    %81 = vector.extract_strided_slice %60 {offsets = [2, 0], sizes = [1, 15], strides = [1, 1]} : vector<3x15xf32> to vector<1x15xf32>
    %82 = vector.broadcast %81 : vector<1x15xf32> to vector<3x15xf32>
    %83 = arith.mulf %61, %82 : vector<3x15xf32>
    %cst_36 = arith.constant dense<0.000000e+00> : vector<3xf32>
    %84 = vector.multi_reduction <add>, %83, %cst_36 [1] : vector<3x15xf32> to vector<3xf32>
    %85 = vector.shape_cast %84 : vector<3xf32> to vector<3x1xf32>
    %86 = vector.extract_strided_slice %59 {offsets = [2, 0], sizes = [1, 15], strides = [1, 1]} : vector<3x15xf32> to vector<1x15xf32>
    %87 = vector.broadcast %85 : vector<3x1xf32> to vector<3x15xf32>
    %88 = vector.broadcast %86 : vector<1x15xf32> to vector<3x15xf32>
    %89 = arith.mulf %87, %88 : vector<3x15xf32>
    %90 = arith.addf %80, %89 : vector<3x15xf32>
    %91 = vector.extract_strided_slice %58 {offsets = [6, 30], sizes = [3, 15], strides = [1, 1]} : vector<15x90xf32> to vector<3x15xf32>
    %92 = vector.extract_strided_slice %58 {offsets = [12, 60], sizes = [3, 15], strides = [1, 1]} : vector<15x90xf32> to vector<3x15xf32>
    %93 = vector.extract_strided_slice %91 {offsets = [0, 0], sizes = [1, 15], strides = [1, 1]} : vector<3x15xf32> to vector<1x15xf32>
    %94 = vector.broadcast %93 : vector<1x15xf32> to vector<3x15xf32>
    %95 = arith.mulf %92, %94 : vector<3x15xf32>
    %cst_37 = arith.constant dense<0.000000e+00> : vector<3xf32>
    %96 = vector.multi_reduction <add>, %95, %cst_37 [1] : vector<3x15xf32> to vector<3xf32>
    %97 = vector.shape_cast %96 : vector<3xf32> to vector<3x1xf32>
    %98 = vector.extract_strided_slice %59 {offsets = [0, 0], sizes = [1, 15], strides = [1, 1]} : vector<3x15xf32> to vector<1x15xf32>
    %99 = vector.broadcast %97 : vector<3x1xf32> to vector<3x15xf32>
    %100 = vector.broadcast %98 : vector<1x15xf32> to vector<3x15xf32>
    %101 = arith.mulf %99, %100 : vector<3x15xf32>
    %102 = vector.extract_strided_slice %91 {offsets = [1, 0], sizes = [1, 15], strides = [1, 1]} : vector<3x15xf32> to vector<1x15xf32>
    %103 = vector.broadcast %102 : vector<1x15xf32> to vector<3x15xf32>
    %104 = arith.mulf %92, %103 : vector<3x15xf32>
    %cst_38 = arith.constant dense<0.000000e+00> : vector<3xf32>
    %105 = vector.multi_reduction <add>, %104, %cst_38 [1] : vector<3x15xf32> to vector<3xf32>
    %106 = vector.shape_cast %105 : vector<3xf32> to vector<3x1xf32>
    %107 = vector.extract_strided_slice %59 {offsets = [1, 0], sizes = [1, 15], strides = [1, 1]} : vector<3x15xf32> to vector<1x15xf32>
    %108 = vector.broadcast %106 : vector<3x1xf32> to vector<3x15xf32>
    %109 = vector.broadcast %107 : vector<1x15xf32> to vector<3x15xf32>
    %110 = arith.mulf %108, %109 : vector<3x15xf32>
    %111 = arith.addf %101, %110 : vector<3x15xf32>
    %112 = vector.extract_strided_slice %91 {offsets = [2, 0], sizes = [1, 15], strides = [1, 1]} : vector<3x15xf32> to vector<1x15xf32>
    %113 = vector.broadcast %112 : vector<1x15xf32> to vector<3x15xf32>
    %114 = arith.mulf %92, %113 : vector<3x15xf32>
    %cst_39 = arith.constant dense<0.000000e+00> : vector<3xf32>
    %115 = vector.multi_reduction <add>, %114, %cst_39 [1] : vector<3x15xf32> to vector<3xf32>
    %116 = vector.shape_cast %115 : vector<3xf32> to vector<3x1xf32>
    %117 = vector.extract_strided_slice %59 {offsets = [2, 0], sizes = [1, 15], strides = [1, 1]} : vector<3x15xf32> to vector<1x15xf32>
    %118 = vector.broadcast %116 : vector<3x1xf32> to vector<3x15xf32>
    %119 = vector.broadcast %117 : vector<1x15xf32> to vector<3x15xf32>
    %120 = arith.mulf %118, %119 : vector<3x15xf32>
    %121 = arith.addf %111, %120 : vector<3x15xf32>
    %122 = tpu.concatenate %90, %121 in 1 : vector<3x15xf32>, vector<3x15xf32> -> vector<3x30xf32>
    %123 = vector.extract_strided_slice %58 {offsets = [0, 15], sizes = [3, 15], strides = [1, 1]} : vector<15x90xf32> to vector<3x15xf32>
    %124 = vector.extract_strided_slice %58 {offsets = [3, 45], sizes = [3, 15], strides = [1, 1]} : vector<15x90xf32> to vector<3x15xf32>
    %125 = vector.extract_strided_slice %58 {offsets = [9, 75], sizes = [3, 15], strides = [1, 1]} : vector<15x90xf32> to vector<3x15xf32>
    %126 = vector.extract_strided_slice %124 {offsets = [0, 0], sizes = [1, 15], strides = [1, 1]} : vector<3x15xf32> to vector<1x15xf32>
    %127 = vector.broadcast %126 : vector<1x15xf32> to vector<3x15xf32>
    %128 = arith.mulf %125, %127 : vector<3x15xf32>
    %cst_40 = arith.constant dense<0.000000e+00> : vector<3xf32>
    %129 = vector.multi_reduction <add>, %128, %cst_40 [1] : vector<3x15xf32> to vector<3xf32>
    %130 = vector.shape_cast %129 : vector<3xf32> to vector<3x1xf32>
    %131 = vector.extract_strided_slice %123 {offsets = [0, 0], sizes = [1, 15], strides = [1, 1]} : vector<3x15xf32> to vector<1x15xf32>
    %132 = vector.broadcast %130 : vector<3x1xf32> to vector<3x15xf32>
    %133 = vector.broadcast %131 : vector<1x15xf32> to vector<3x15xf32>
    %134 = arith.mulf %132, %133 : vector<3x15xf32>
    %135 = vector.extract_strided_slice %124 {offsets = [1, 0], sizes = [1, 15], strides = [1, 1]} : vector<3x15xf32> to vector<1x15xf32>
    %136 = vector.broadcast %135 : vector<1x15xf32> to vector<3x15xf32>
    %137 = arith.mulf %125, %136 : vector<3x15xf32>
    %cst_41 = arith.constant dense<0.000000e+00> : vector<3xf32>
    %138 = vector.multi_reduction <add>, %137, %cst_41 [1] : vector<3x15xf32> to vector<3xf32>
    %139 = vector.shape_cast %138 : vector<3xf32> to vector<3x1xf32>
    %140 = vector.extract_strided_slice %123 {offsets = [1, 0], sizes = [1, 15], strides = [1, 1]} : vector<3x15xf32> to vector<1x15xf32>
    %141 = vector.broadcast %139 : vector<3x1xf32> to vector<3x15xf32>
    %142 = vector.broadcast %140 : vector<1x15xf32> to vector<3x15xf32>
    %143 = arith.mulf %141, %142 : vector<3x15xf32>
    %144 = arith.addf %134, %143 : vector<3x15xf32>
    %145 = vector.extract_strided_slice %124 {offsets = [2, 0], sizes = [1, 15], strides = [1, 1]} : vector<3x15xf32> to vector<1x15xf32>
    %146 = vector.broadcast %145 : vector<1x15xf32> to vector<3x15xf32>
    %147 = arith.mulf %125, %146 : vector<3x15xf32>
    %cst_42 = arith.constant dense<0.000000e+00> : vector<3xf32>
    %148 = vector.multi_reduction <add>, %147, %cst_42 [1] : vector<3x15xf32> to vector<3xf32>
    %149 = vector.shape_cast %148 : vector<3xf32> to vector<3x1xf32>
    %150 = vector.extract_strided_slice %123 {offsets = [2, 0], sizes = [1, 15], strides = [1, 1]} : vector<3x15xf32> to vector<1x15xf32>
    %151 = vector.broadcast %149 : vector<3x1xf32> to vector<3x15xf32>
    %152 = vector.broadcast %150 : vector<1x15xf32> to vector<3x15xf32>
    %153 = arith.mulf %151, %152 : vector<3x15xf32>
    %154 = arith.addf %144, %153 : vector<3x15xf32>
    %155 = vector.extract_strided_slice %58 {offsets = [6, 45], sizes = [3, 15], strides = [1, 1]} : vector<15x90xf32> to vector<3x15xf32>
    %156 = vector.extract_strided_slice %58 {offsets = [12, 75], sizes = [3, 15], strides = [1, 1]} : vector<15x90xf32> to vector<3x15xf32>
    %157 = vector.extract_strided_slice %155 {offsets = [0, 0], sizes = [1, 15], strides = [1, 1]} : vector<3x15xf32> to vector<1x15xf32>
    %158 = vector.broadcast %157 : vector<1x15xf32> to vector<3x15xf32>
    %159 = arith.mulf %156, %158 : vector<3x15xf32>
    %cst_43 = arith.constant dense<0.000000e+00> : vector<3xf32>
    %160 = vector.multi_reduction <add>, %159, %cst_43 [1] : vector<3x15xf32> to vector<3xf32>
    %161 = vector.shape_cast %160 : vector<3xf32> to vector<3x1xf32>
    %162 = vector.extract_strided_slice %123 {offsets = [0, 0], sizes = [1, 15], strides = [1, 1]} : vector<3x15xf32> to vector<1x15xf32>
    %163 = vector.broadcast %161 : vector<3x1xf32> to vector<3x15xf32>
    %164 = vector.broadcast %162 : vector<1x15xf32> to vector<3x15xf32>
    %165 = arith.mulf %163, %164 : vector<3x15xf32>
    %166 = vector.extract_strided_slice %155 {offsets = [1, 0], sizes = [1, 15], strides = [1, 1]} : vector<3x15xf32> to vector<1x15xf32>
    %167 = vector.broadcast %166 : vector<1x15xf32> to vector<3x15xf32>
    %168 = arith.mulf %156, %167 : vector<3x15xf32>
    %cst_44 = arith.constant dense<0.000000e+00> : vector<3xf32>
    %169 = vector.multi_reduction <add>, %168, %cst_44 [1] : vector<3x15xf32> to vector<3xf32>
    %170 = vector.shape_cast %169 : vector<3xf32> to vector<3x1xf32>
    %171 = vector.extract_strided_slice %123 {offsets = [1, 0], sizes = [1, 15], strides = [1, 1]} : vector<3x15xf32> to vector<1x15xf32>
    %172 = vector.broadcast %170 : vector<3x1xf32> to vector<3x15xf32>
    %173 = vector.broadcast %171 : vector<1x15xf32> to vector<3x15xf32>
    %174 = arith.mulf %172, %173 : vector<3x15xf32>
    %175 = arith.addf %165, %174 : vector<3x15xf32>
    %176 = vector.extract_strided_slice %155 {offsets = [2, 0], sizes = [1, 15], strides = [1, 1]} : vector<3x15xf32> to vector<1x15xf32>
    %177 = vector.broadcast %176 : vector<1x15xf32> to vector<3x15xf32>
    %178 = arith.mulf %156, %177 : vector<3x15xf32>
    %cst_45 = arith.constant dense<0.000000e+00> : vector<3xf32>
    %179 = vector.multi_reduction <add>, %178, %cst_45 [1] : vector<3x15xf32> to vector<3xf32>
    %180 = vector.shape_cast %179 : vector<3xf32> to vector<3x1xf32>
    %181 = vector.extract_strided_slice %123 {offsets = [2, 0], sizes = [1, 15], strides = [1, 1]} : vector<3x15xf32> to vector<1x15xf32>
    %182 = vector.broadcast %180 : vector<3x1xf32> to vector<3x15xf32>
    %183 = vector.broadcast %181 : vector<1x15xf32> to vector<3x15xf32>
    %184 = arith.mulf %182, %183 : vector<3x15xf32>
    %185 = arith.addf %175, %184 : vector<3x15xf32>
    %186 = tpu.concatenate %154, %185 in 1 : vector<3x15xf32>, vector<3x15xf32> -> vector<3x30xf32>
    %187 = tpu.concatenate %122, %186 in 0 : vector<3x30xf32>, vector<3x30xf32> -> vector<6x30xf32>
    %c352 = arith.constant 352 : index
    %c0_46 = arith.constant 0 : index
    %188 = vector.load %arg2[%c352, %c0_46] : memref<536x64xf32, #tpu.memory_space<vmem>>, vector<32x6xf32>
    %189 = math.tanh %187 : vector<6x30xf32>
    %cst_47 = arith.constant dense<0.000000e+00> : vector<32x30xf32>
    %190 = tpu.matmul %188, %189, %cst_47 {dimension_numbers = #tpu.dot_dimension_numbers<[1], [0], [0], [1], [0, 0, 1, 1], [], []>} : vector<32x6xf32>, vector<6x30xf32>, vector<32x30xf32> -> vector<32x30xf32>
    %cst_48 = arith.constant 0.000000e+00 : f32
    %191 = vector.broadcast %cst_48 : f32 to vector<32x30xf32>
    %192 = arith.maximumf %190, %191 : vector<32x30xf32>
    %c384 = arith.constant 384 : index
    %c0_49 = arith.constant 0 : index
    %193 = vector.load %arg2[%c384, %c0_49] : memref<536x64xf32, #tpu.memory_space<vmem>>, vector<3x32xf32>
    %cst_50 = arith.constant dense<0.000000e+00> : vector<3x30xf32>
    %194 = tpu.matmul %193, %192, %cst_50 {dimension_numbers = #tpu.dot_dimension_numbers<[1], [0], [0], [1], [0, 0, 1, 1], [], []>} : vector<3x32xf32>, vector<32x30xf32>, vector<3x30xf32> -> vector<3x30xf32>
    %195 = math.tanh %194 : vector<3x30xf32>
    %c392 = arith.constant 392 : index
    %c0_51 = arith.constant 0 : index
    %196 = vector.load %arg2[%c392, %c0_51] : memref<536x64xf32, #tpu.memory_space<vmem>>, vector<30x64xf32>
    %cst_52 = arith.constant dense<0.000000e+00> : vector<3x64xf32>
    %197 = tpu.matmul %195, %196, %cst_52 {dimension_numbers = #tpu.dot_dimension_numbers<[1], [0], [0], [1], [0, 0, 1, 1], [], []>} : vector<3x30xf32>, vector<30x64xf32>, vector<3x64xf32> -> vector<3x64xf32>
    %cst_53 = arith.constant 0.000000e+00 : f32
    %198 = vector.broadcast %cst_53 : f32 to vector<3x64xf32>
    %199 = arith.maximumf %197, %198 : vector<3x64xf32>
    %c424 = arith.constant 424 : index
    %c0_54 = arith.constant 0 : index
    %200 = vector.load %arg2[%c424, %c0_54] : memref<536x64xf32, #tpu.memory_space<vmem>>, vector<64x30xf32>
    %cst_55 = arith.constant dense<0.000000e+00> : vector<3x30xf32>
    %201 = tpu.matmul %199, %200, %cst_55 {dimension_numbers = #tpu.dot_dimension_numbers<[1], [0], [0], [1], [0, 0, 1, 1], [], []>} : vector<3x64xf32>, vector<64x30xf32>, vector<3x30xf32> -> vector<3x30xf32>
    %202 = math.tanh %201 : vector<3x30xf32>
    %c488 = arith.constant 488 : index
    %c0_56 = arith.constant 0 : index
    %203 = vector.load %arg2[%c488, %c0_56] : memref<536x64xf32, #tpu.memory_space<vmem>>, vector<30x32xf32>
    %cst_57 = arith.constant dense<0.000000e+00> : vector<3x32xf32>
    %204 = tpu.matmul %202, %203, %cst_57 {dimension_numbers = #tpu.dot_dimension_numbers<[1], [0], [0], [1], [0, 0, 1, 1], [], []>} : vector<3x30xf32>, vector<30x32xf32>, vector<3x32xf32> -> vector<3x32xf32>
    %c528 = arith.constant 528 : index
    %c0_58 = arith.constant 0 : index
    %205 = vector.load %arg2[%c528, %c0_58] : memref<536x64xf32, #tpu.memory_space<vmem>>, vector<3x1xf32>
    %206 = vector.broadcast %205 : vector<3x1xf32> to vector<3x32xf32>
    %207 = arith.addf %204, %206 : vector<3x32xf32>
    %c520 = arith.constant 520 : index
    %c0_59 = arith.constant 0 : index
    %208 = vector.load %arg2[%c520, %c0_59] : memref<536x64xf32, #tpu.memory_space<vmem>>, vector<3x1xf32>
    %c0_60 = arith.constant 0 : index
    %c0_61 = arith.constant 0 : index
    %209 = vector.load %arg1[%c0_60, %c0_61] : memref<9x16xf32, #tpu.memory_space<vmem>>, vector<3x1xf32>
    %210 = vector.shape_cast %209 : vector<3x1xf32> to vector<3x1xf32>
    %211 = vector.broadcast %210 : vector<3x1xf32> to vector<3x16xf32>
    %212 = vector.extract_strided_slice %207 {offsets = [0, 15], sizes = [3, 1], strides = [1, 1]} : vector<3x32xf32> to vector<3x1xf32>
    %213 = arith.mulf %208, %212 : vector<3x1xf32>
    %214 = arith.addf %209, %213 : vector<3x1xf32>
    %215 = vector.shape_cast %214 : vector<3x1xf32> to vector<3x1xf32>
    %216 = vector.broadcast %215 : vector<3x1xf32> to vector<3x16xf32>
    %217 = vector.broadcast %208 : vector<3x1xf32> to vector<3x32xf32>
    %218 = arith.mulf %207, %217 : vector<3x32xf32>
    %219 = tpu.concatenate %211, %216 in 1 : vector<3x16xf32>, vector<3x16xf32> -> vector<3x32xf32>
    %220 = arith.addf %218, %219 : vector<3x32xf32>
    %c0_62 = arith.constant 0 : index
    %c0_63 = arith.constant 0 : index
    %221 = vector.load %arg4[%c0_62, %c0_63] : memref<3x32xf32, #tpu.memory_space<vmem>>, vector<3x32xf32>
    tpu.vector_store %arg4[%c0_62, %c0_63], %220 {strides = array<i32>} : memref<3x32xf32, #tpu.memory_space<vmem>>, vector<3x32xf32>,
    return
  }
  func.func @transform_0(%arg0: i32) -> (i32, i32) {
    %c0_i32 = arith.constant 0 : i32
    %c0_i32_0 = arith.constant 0 : i32
    %c0_i32_1 = arith.constant 0 : i32
    return %c0_i32, %c0_i32_0 : i32, i32
  }
  func.func @transform_1(%arg0: i32) -> (i32, i32) {
    %c0_i32 = arith.constant 0 : i32
    %c0_i32_0 = arith.constant 0 : i32
    %c0_i32_1 = arith.constant 0 : i32
    return %c0_i32, %c0_i32_0 : i32, i32
  }
  func.func @transform_2(%arg0: i32) -> (i32, i32) {
    %c0_i32 = arith.constant 0 : i32
    %c0_i32_0 = arith.constant 0 : i32
    %c0_i32_1 = arith.constant 0 : i32
    return %c0_i32, %c0_i32_0 : i32, i32
  }
  func.func @transform_3(%arg0: i32) -> (i32, i32) {
    %c0_i32 = arith.constant 0 : i32
    %c0_i32_0 = arith.constant 0 : i32
    %c0_i32_1 = arith.constant 0 : i32
    return %c0_i32, %c0_i32_0 : i32, i32
  }
}

</mosaic_0001>

<llo_original>
// kernel: forward.1
$region0: #{forward.1}
  #allocation0 [shape = 'u32[]', space=smem, size = 0x4, offset = 0x4, fixed_abs, tag = 'smem constant byte address 0x4 - core index']
  #allocation1 [shape = 'u32[144,128]{1,0:T(1,128)}', space=vmem, size = 0x12000, scoped, tag = 'internal scratch']
  %s0 = inlined_call_operand.vmem [shape: f32[9,16], index: 0, kind: input, shape index: {}]
  %s1 = inlined_call_operand.vmem [shape: f32[536,64], index: 1, kind: input, shape index: {}]
  %s2 = inlined_call_operand.vmem [shape: f32[208,192], index: 2, kind: input, shape index: {}]
  %s3 = inlined_call_operand.vmem [shape: f32[3,32], index: 3, kind: output, shape index: {}]
  %s4 = sld [smem:[#allocation0]]
  $region22: #{forward.1} parent=0
    _
  %s6 = ssub.s32 1, %s4
  %s7 = scalar_select 0, %s6, %s4
  // Predicated region
  $region2: #{forward.1} parent=0 // pred_check
    _
  $region3: #{forward.1} parent=0 // pred_check_branch
    %9 = sbr.rel (0) target = $region5
  $region4: #{forward.1} parent=0 // pred_region
    _
  $region5: #{forward.1} parent=0 // pred_fallthru
    _
  // Predicated region
  $region6: #{forward.1} parent=0 // pred_check
    _
  $region7: #{forward.1} parent=0 // pred_check_branch
    %11 = sbr.rel (0) target = $region9
  $region8: #{forward.1} parent=0 // pred_region
    _
  $region9: #{forward.1} parent=0 // pred_fallthru
    _
  // Predicated region
  $region10: #{forward.1} parent=0 // pred_check
    _
  $region11: #{forward.1} parent=0 // pred_check_branch
    %13 = sbr.rel (0) target = $region13
  $region12: #{forward.1} parent=0 // pred_region
    _
  $region13: #{forward.1} parent=0 // pred_fallthru
    _
  %v14 = vld [vmem:[%s0] sm:$0xff]
  %v15 = vld [vmem:[%s0 + $0x8] sm:$0x1]
  %v16 = vtanh.pop %v14
  %v17 = vtanh.pop %v15
  %v18 = vld [vmem:[%s1] sm:$0xff]
  %v19 = vld [vmem:[%s1 + $0x8] sm:$0xff]
  %vm20 = vcmask 130048
  %v22 = vsel %vm20, %v16, 0
  %v25 = vsel %vm20, %v17, 0
  %27 = vmatprep.subr.mxu0 0.0
  %28 = vmatpush1.msra.mxu0 %v18
  %29 = vmatprep.subr.mxu0 0.0
  %30 = vmatpush1.msra.mxu0 %v19
  %31 = vmatprep.subr.mxu0 0.0
  %32 = vmatpush1.msra.mxu0 0.0
  %33 = vmatprep.subr.mxu0 0.0
  %34 = vmatpush1.msra.mxu0 0.0
  %35 = vmatprep.subr.mxu0 0.0
  %36 = vmatpush1.msra.mxu0 0.0
  %37 = vmatprep.subr.mxu0 0.0
  %38 = vmatpush1.msra.mxu0 0.0
  %39 = vmatprep.subr.mxu0 0.0
  %40 = vmatpush1.msra.mxu0 0.0
  %41 = vmatprep.subr.mxu0 0.0
  %42 = vmatpush1.msra.mxu0 0.0
  %43 = vmatprep.subr.mxu0 0.0
  %44 = vmatpush1.msra.mxu0 0.0
  %45 = vmatprep.subr.mxu0 0.0
  %46 = vmatpush1.msra.mxu0 0.0
  %47 = vmatprep.subr.mxu0 0.0
  %48 = vmatpush1.msra.mxu0 0.0
  %49 = vmatprep.subr.mxu0 0.0
  %50 = vmatpush1.msra.mxu0 0.0
  %51 = vmatprep.subr.mxu0 0.0
  %52 = vmatpush1.msra.mxu0 0.0
  %53 = vmatprep.subr.mxu0 0.0
  %54 = vmatpush1.msra.mxu0 0.0
  %55 = vmatprep.subr.mxu0 0.0
  %56 = vmatpush1.msra.mxu0 0.0
  %57 = vmatprep.subr.mxu0 0.0
  %58 = vmatpush1.msra.mxu0 0.0
  %59 = vmatprep.subr.mxu0 0.0
  %60 = vmatpush1.msra.mxu0 0.0
  %61 = vmatprep.subr.mxu0 0.0
  %62 = vmatpush1.msra.mxu0 0.0
  %63 = vmatprep.subr.mxu0 0.0
  %64 = vmatpush1.msra.mxu0 0.0
  %65 = vmatprep.subr.mxu0 0.0
  %66 = vmatpush1.msra.mxu0 0.0
  %67 = vmatprep.subr.mxu0 0.0
  %68 = vmatpush1.msra.mxu0 0.0
  %69 = vmatprep.subr.mxu0 0.0
  %70 = vmatpush1.msra.mxu0 0.0
  %71 = vmatprep.subr.mxu0 0.0
  %72 = vmatpush1.msra.mxu0 0.0
  %73 = vmatprep.subr.mxu0 0.0
  %74 = vmatpush1.msra.mxu0 0.0
  %75 = vmatprep.subr.mxu0 0.0
  %76 = vmatpush1.msra.mxu0 0.0
  %77 = vmatprep.subr.mxu0 0.0
  %78 = vmatpush1.msra.mxu0 0.0
  %79 = vmatprep.subr.mxu0 0.0
  %80 = vmatpush1.msra.mxu0 0.0
  %81 = vmatprep.subr.mxu0 0.0
  %82 = vmatpush1.msra.mxu0 0.0
  %83 = vmatprep.subr.mxu0 0.0
  %84 = vmatpush1.msra.mxu0 0.0
  %85 = vmatprep.subr.mxu0 0.0
  %86 = vmatpush1.msra.mxu0 0.0
  %87 = vmatprep.subr.mxu0 0.0
  %88 = vmatpush1.msra.mxu0 0.0
  %89 = vmatprep.subr.mxu0 0.0
  %90 = vmatpush1.msra.mxu0 0.0
  %91 = vmatprep.mubr.f32.mxu0 0.0
  %92 = vmatmul.mubr.f32.gmra.mrb[0].mxu0 %v22
  %v93 = vpop.f32.mrb[0].mxu0
  %v94 = vadd.f32 0.0, %v93
  %v95 = vpop.f32.mrb[0].mxu0
  %96 = vmatprep.mubr.f32.mxu0 0.0
  %97 = vmatmul.mubr.f32.gmra.mrb[0].mxu0 %v25
  %v98 = vpop.f32.mrb[0].mxu0
  %v99 = vadd.f32 0.0, %v98
  %v100 = vpop.f32.mrb[0].mxu0
  %101 = vdwg.mxu0
  %v102 = vmax.f32 %v94, 0.0
  %v103 = vmax.f32 %v99, 0.0
  %v104 = vld [vmem:[%s1 + $0x10] sm:$0xff]
  %v105 = vld [vmem:[%s1 + $0x18] sm:$0xff]
  %v106 = vld [vmem:[%s1 + $0x20] sm:$0xff]
  %v107 = vld [vmem:[%s1 + $0x28] sm:$0xff]
  %v108 = vld [vmem:[%s1 + $0x30] sm:$0xff]
  %v109 = vld [vmem:[%s1 + $0x38] sm:$0xff]
  %v110 = vld [vmem:[%s1 + $0x40] sm:$0xff]
  %v111 = vld [vmem:[%s1 + $0x48] sm:$0xff]
  %vm112 = vcmask 523264
  %v114 = vsel %vm112, %v102, 0
  %v117 = vsel %vm112, %v103, 0
  %119 = vmatprep.subr.mxu0 0.0
  %120 = vmatpush1.msra.mxu0 %v104
  %121 = vmatprep.subr.mxu0 0.0
  %122 = vmatpush1.msra.mxu0 %v105
  %123 = vmatprep.subr.mxu0 0.0
  %124 = vmatpush1.msra.mxu0 %v106
  %125 = vmatprep.subr.mxu0 0.0
  %126 = vmatpush1.msra.mxu0 %v107
  %127 = vmatprep.subr.mxu0 0.0
  %128 = vmatpush1.msra.mxu0 %v108
  %129 = vmatprep.subr.mxu0 0.0
  %130 = vmatpush1.msra.mxu0 %v109
  %131 = vmatprep.subr.mxu0 0.0
  %132 = vmatpush1.msra.mxu0 %v110
  %133 = vmatprep.subr.mxu0 0.0
  %134 = vmatpush1.msra.mxu0 %v111
  %135 = vmatprep.subr.mxu0 0.0
  %136 = vmatpush1.msra.mxu0 0.0
  %137 = vmatprep.subr.mxu0 0.0
  %138 = vmatpush1.msra.mxu0 0.0
  %139 = vmatprep.subr.mxu0 0.0
  %140 = vmatpush1.msra.mxu0 0.0
  %141 = vmatprep.subr.mxu0 0.0
  %142 = vmatpush1.msra.mxu0 0.0
  %143 = vmatprep.subr.mxu0 0.0
  %144 = vmatpush1.msra.mxu0 0.0
  %145 = vmatprep.subr.mxu0 0.0
  %146 = vmatpush1.msra.mxu0 0.0
  %147 = vmatprep.subr.mxu0 0.0
  %148 = vmatpush1.msra.mxu0 0.0
  %149 = vmatprep.subr.mxu0 0.0
  %150 = vmatpush1.msra.mxu0 0.0
  %151 = vmatprep.subr.mxu0 0.0
  %152 = vmatpush1.msra.mxu0 0.0
  %153 = vmatprep.subr.mxu0 0.0
  %154 = vmatpush1.msra.mxu0 0.0
  %155 = vmatprep.subr.mxu0 0.0
  %156 = vmatpush1.msra.mxu0 0.0
  %157 = vmatprep.subr.mxu0 0.0
  %158 = vmatpush1.msra.mxu0 0.0
  %159 = vmatprep.subr.mxu0 0.0
  %160 = vmatpush1.msra.mxu0 0.0
  %161 = vmatprep.subr.mxu0 0.0
  %162 = vmatpush1.msra.mxu0 0.0
  %163 = vmatprep.subr.mxu0 0.0
  %164 = vmatpush1.msra.mxu0 0.0
  %165 = vmatprep.subr.mxu0 0.0
  %166 = vmatpush1.msra.mxu0 0.0
  %167 = vmatprep.subr.mxu0 0.0
  %168 = vmatpush1.msra.mxu0 0.0
  %169 = vmatprep.subr.mxu0 0.0
  %170 = vmatpush1.msra.mxu0 0.0
  %171 = vmatprep.subr.mxu0 0.0
  %172 = vmatpush1.msra.mxu0 0.0
  %173 = vmatprep.subr.mxu0 0.0
  %174 = vmatpush1.msra.mxu0 0.0
  %175 = vmatprep.subr.mxu0 0.0
  %176 = vmatpush1.msra.mxu0 0.0
  %177 = vmatprep.subr.mxu0 0.0
  %178 = vmatpush1.msra.mxu0 0.0
  %179 = vmatprep.subr.mxu0 0.0
  %180 = vmatpush1.msra.mxu0 0.0
  %181 = vmatprep.subr.mxu0 0.0
  %182 = vmatpush1.msra.mxu0 0.0
  %183 = vmatprep.mubr.f32.mxu0 0.0
  %184 = vmatmul.mubr.f32.gmra.mrb[0].mxu0 %v114
  %v185 = vpop.f32.mrb[0].mxu0
  %v186 = vadd.f32 0.0, %v185
  %v187 = vpop.f32.mrb[0].mxu0
  %188 = vmatprep.mubr.f32.mxu0 0.0
  %189 = vmatmul.mubr.f32.gmra.mrb[0].mxu0 %v117
  %v190 = vpop.f32.mrb[0].mxu0
  %v191 = vadd.f32 0.0, %v190
  %v192 = vpop.f32.mrb[0].mxu0
  %193 = vdwg.mxu0
  %v194 = vmax.f32 %v186, 0.0
  %v195 = vmax.f32 %v191, 0.0
  %v196 = vld [vmem:[%s1 + $0x50] sm:$0xff]
  %v197 = vld [vmem:[%s1 + $0x58] sm:$0xff]
  %v198 = vld [vmem:[%s1 + $0x60] sm:$0xff]
  %v199 = vld [vmem:[%s1 + $0x68] sm:$0xff]
  %v200 = vld [vmem:[%s1 + $0x70] sm:$0xff]
  %v201 = vld [vmem:[%s1 + $0x78] sm:$0xff]
  %v202 = vld [vmem:[%s1 + $0x80] sm:$0xff]
  %v203 = vld [vmem:[%s1 + $0x88] sm:$0xff]
  %v205 = vsel %vm112, %v194, 0
  %v208 = vsel %vm112, %v195, 0
  %210 = vmatprep.subr.mxu0 0.0
  %211 = vmatpush1.msra.mxu0 %v196
  %212 = vmatprep.subr.mxu0 0.0
  %213 = vmatpush1.msra.mxu0 %v197
  %214 = vmatprep.subr.mxu0 0.0
  %215 = vmatpush1.msra.mxu0 %v198
  %216 = vmatprep.subr.mxu0 0.0
  %217 = vmatpush1.msra.mxu0 %v199
  %218 = vmatprep.subr.mxu0 0.0
  %219 = vmatpush1.msra.mxu0 %v200
  %220 = vmatprep.subr.mxu0 0.0
  %221 = vmatpush1.msra.mxu0 %v201
  %222 = vmatprep.subr.mxu0 0.0
  %223 = vmatpush1.msra.mxu0 %v202
  %224 = vmatprep.subr.mxu0 0.0
  %225 = vmatpush1.msra.mxu0 %v203
  %226 = vmatprep.subr.mxu0 0.0
  %227 = vmatpush1.msra.mxu0 0.0
  %228 = vmatprep.subr.mxu0 0.0
  %229 = vmatpush1.msra.mxu0 0.0
  %230 = vmatprep.subr.mxu0 0.0
  %231 = vmatpush1.msra.mxu0 0.0
  %232 = vmatprep.subr.mxu0 0.0
  %233 = vmatpush1.msra.mxu0 0.0
  %234 = vmatprep.subr.mxu0 0.0
  %235 = vmatpush1.msra.mxu0 0.0
  %236 = vmatprep.subr.mxu0 0.0
  %237 = vmatpush1.msra.mxu0 0.0
  %238 = vmatprep.subr.mxu0 0.0
  %239 = vmatpush1.msra.mxu0 0.0
  %240 = vmatprep.subr.mxu0 0.0
  %241 = vmatpush1.msra.mxu0 0.0
  %242 = vmatprep.subr.mxu0 0.0
  %243 = vmatpush1.msra.mxu0 0.0
  %244 = vmatprep.subr.mxu0 0.0
  %245 = vmatpush1.msra.mxu0 0.0
  %246 = vmatprep.subr.mxu0 0.0
  %247 = vmatpush1.msra.mxu0 0.0
  %248 = vmatprep.subr.mxu0 0.0
  %249 = vmatpush1.msra.mxu0 0.0
  %250 = vmatprep.subr.mxu0 0.0
  %251 = vmatpush1.msra.mxu0 0.0
  %252 = vmatprep.subr.mxu0 0.0
  %253 = vmatpush1.msra.mxu0 0.0
  %254 = vmatprep.subr.mxu0 0.0
  %255 = vmatpush1.msra.mxu0 0.0
  %256 = vmatprep.subr.mxu0 0.0
  %257 = vmatpush1.msra.mxu0 0.0
  %258 = vmatprep.subr.mxu0 0.0
  %259 = vmatpush1.msra.mxu0 0.0
  %260 = vmatprep.subr.mxu0 0.0
  %261 = vmatpush1.msra.mxu0 0.0
  %262 = vmatprep.subr.mxu0 0.0
  %263 = vmatpush1.msra.mxu0 0.0
  %264 = vmatprep.subr.mxu0 0.0
  %265 = vmatpush1.msra.mxu0 0.0
  %266 = vmatprep.subr.mxu0 0.0
  %267 = vmatpush1.msra.mxu0 0.0
  %268 = vmatprep.subr.mxu0 0.0
  %269 = vmatpush1.msra.mxu0 0.0
  %270 = vmatprep.subr.mxu0 0.0
  %271 = vmatpush1.msra.mxu0 0.0
  %272 = vmatprep.subr.mxu0 0.0
  %273 = vmatpush1.msra.mxu0 0.0
  %274 = vmatprep.mubr.f32.mxu0 0.0
  %275 = vmatmul.mubr.f32.gmra.mrb[0].mxu0 %v205
  %v276 = vpop.f32.mrb[0].mxu0
  %v277 = vadd.f32 0.0, %v276
  %v278 = vpop.f32.mrb[0].mxu0
  %279 = vmatprep.mubr.f32.mxu0 0.0
  %280 = vmatmul.mubr.f32.gmra.mrb[0].mxu0 %v208
  %v281 = vpop.f32.mrb[0].mxu0
  %v282 = vadd.f32 0.0, %v281
  %v283 = vpop.f32.mrb[0].mxu0
  %284 = vdwg.mxu0
  %v285 = vtanh.pop %v277
  %v286 = vtanh.pop %v282
  %v287 = vld [vmem:[%s1 + $0x90] sm:$0xff]
  %v288 = vld [vmem:[%s1 + $0x98] sm:$0xff]
  %v289 = vld [vmem:[%s1 + $0xa0] sm:$0xff]
  %v290 = vld [vmem:[%s1 + $0xa8] sm:$0x3f]
  %vm291 = vcmask 244736
  %v293 = vsel %vm291, %v285, 0
  %v296 = vsel %vm291, %v286, 0
  %vm298 = vcmask 1045504
  %v300 = vsel %vm298, %v290, 0
  %302 = vmatprep.subr.mxu0 0.0
  %303 = vmatpush1.msra.mxu0 %v287
  %304 = vmatprep.subr.mxu0 0.0
  %305 = vmatpush1.msra.mxu0 %v288
  %306 = vmatprep.subr.mxu0 0.0
  %307 = vmatpush1.msra.mxu0 %v289
  %308 = vmatprep.subr.mxu0 0.0
  %309 = vmatpush1.msra.mxu0 %v300
  %310 = vmatprep.subr.mxu0 0.0
  %311 = vmatpush1.msra.mxu0 0.0
  %312 = vmatprep.subr.mxu0 0.0
  %313 = vmatpush1.msra.mxu0 0.0
  %314 = vmatprep.subr.mxu0 0.0
  %315 = vmatpush1.msra.mxu0 0.0
  %316 = vmatprep.subr.mxu0 0.0
  %317 = vmatpush1.msra.mxu0 0.0
  %318 = vmatprep.subr.mxu0 0.0
  %319 = vmatpush1.msra.mxu0 0.0
  %320 = vmatprep.subr.mxu0 0.0
  %321 = vmatpush1.msra.mxu0 0.0
  %322 = vmatprep.subr.mxu0 0.0
  %323 = vmatpush1.msra.mxu0 0.0
  %324 = vmatprep.subr.mxu0 0.0
  %325 = vmatpush1.msra.mxu0 0.0
  %326 = vmatprep.subr.mxu0 0.0
  %327 = vmatpush1.msra.mxu0 0.0
  %328 = vmatprep.subr.mxu0 0.0
  %329 = vmatpush1.msra.mxu0 0.0
  %330 = vmatprep.subr.mxu0 0.0
  %331 = vmatpush1.msra.mxu0 0.0
  %332 = vmatprep.subr.mxu0 0.0
  %333 = vmatpush1.msra.mxu0 0.0
  %334 = vmatprep.subr.mxu0 0.0
  %335 = vmatpush1.msra.mxu0 0.0
  %336 = vmatprep.subr.mxu0 0.0
  %337 = vmatpush1.msra.mxu0 0.0
  %338 = vmatprep.subr.mxu0 0.0
  %339 = vmatpush1.msra.mxu0 0.0
  %340 = vmatprep.subr.mxu0 0.0
  %341 = vmatpush1.msra.mxu0 0.0
  %342 = vmatprep.subr.mxu0 0.0
  %343 = vmatpush1.msra.mxu0 0.0
  %344 = vmatprep.subr.mxu0 0.0
  %345 = vmatpush1.msra.mxu0 0.0
  %346 = vmatprep.subr.mxu0 0.0
  %347 = vmatpush1.msra.mxu0 0.0
  %348 = vmatprep.subr.mxu0 0.0
  %349 = vmatpush1.msra.mxu0 0.0
  %350 = vmatprep.subr.mxu0 0.0
  %351 = vmatpush1.msra.mxu0 0.0
  %352 = vmatprep.subr.mxu0 0.0
  %353 = vmatpush1.msra.mxu0 0.0
  %354 = vmatprep.subr.mxu0 0.0
  %355 = vmatpush1.msra.mxu0 0.0
  %356 = vmatprep.subr.mxu0 0.0
  %357 = vmatpush1.msra.mxu0 0.0
  %358 = vmatprep.subr.mxu0 0.0
  %359 = vmatpush1.msra.mxu0 0.0
  %360 = vmatprep.subr.mxu0 0.0
  %361 = vmatpush1.msra.mxu0 0.0
  %362 = vmatprep.subr.mxu0 0.0
  %363 = vmatpush1.msra.mxu0 0.0
  %364 = vmatprep.subr.mxu0 0.0
  %365 = vmatpush1.msra.mxu0 0.0
  %366 = vmatprep.mubr.f32.mxu0 0.0
  %367 = vmatmul.mubr.f32.gmra.mrb[0].mxu0 %v293
  %v368 = vpop.f32.mrb[0].mxu0
  %v369 = vadd.f32 0.0, %v368
  %v370 = vpop.f32.mrb[0].mxu0
  %371 = vmatprep.mubr.f32.mxu0 0.0
  %372 = vmatmul.mubr.f32.gmra.mrb[0].mxu0 %v296
  %v373 = vpop.f32.mrb[0].mxu0
  %v374 = vadd.f32 0.0, %v373
  %v375 = vpop.f32.mrb[0].mxu0
  %376 = vdwg.mxu0
  %v377 = vmax.f32 %v369, 0.0
  %v378 = vmax.f32 %v374, 0.0
  %v379 = vld [vmem:[%s1 + $0xb0] sm:$0xff]
  %v380 = vld [vmem:[%s1 + $0xb8] sm:$0xff]
  %v381 = vld [vmem:[%s1 + $0xc0] sm:$0xff]
  %v382 = vld [vmem:[%s1 + $0xc8] sm:$0xff]
  %v383 = vld [vmem:[%s1 + $0xd0] sm:$0xff]
  %v384 = vld [vmem:[%s1 + $0xd8] sm:$0xff]
  %v385 = vld [vmem:[%s1 + $0xe0] sm:$0xff]
  %v386 = vld [vmem:[%s1 + $0xe8] sm:$0xff]
  %v388 = vsel %vm112, %v377, 0
  %v391 = vsel %vm112, %v378, 0
  %393 = vmatprep.subr.mxu0 0.0
  %394 = vmatpush1.msra.mxu0 %v379
  %395 = vmatprep.subr.mxu0 0.0
  %396 = vmatpush1.msra.mxu0 %v380
  %397 = vmatprep.subr.mxu0 0.0
  %398 = vmatpush1.msra.mxu0 %v381
  %399 = vmatprep.subr.mxu0 0.0
  %400 = vmatpush1.msra.mxu0 %v382
  %401 = vmatprep.subr.mxu0 0.0
  %402 = vmatpush1.msra.mxu0 %v383
  %403 = vmatprep.subr.mxu0 0.0
  %404 = vmatpush1.msra.mxu0 %v384
  %405 = vmatprep.subr.mxu0 0.0
  %406 = vmatpush1.msra.mxu0 %v385
  %407 = vmatprep.subr.mxu0 0.0
  %408 = vmatpush1.msra.mxu0 %v386
  %409 = vmatprep.subr.mxu0 0.0
  %410 = vmatpush1.msra.mxu0 0.0
  %411 = vmatprep.subr.mxu0 0.0
  %412 = vmatpush1.msra.mxu0 0.0
  %413 = vmatprep.subr.mxu0 0.0
  %414 = vmatpush1.msra.mxu0 0.0
  %415 = vmatprep.subr.mxu0 0.0
  %416 = vmatpush1.msra.mxu0 0.0
  %417 = vmatprep.subr.mxu0 0.0
  %418 = vmatpush1.msra.mxu0 0.0
  %419 = vmatprep.subr.mxu0 0.0
  %420 = vmatpush1.msra.mxu0 0.0
  %421 = vmatprep.subr.mxu0 0.0
  %422 = vmatpush1.msra.mxu0 0.0
  %423 = vmatprep.subr.mxu0 0.0
  %424 = vmatpush1.msra.mxu0 0.0
  %425 = vmatprep.subr.mxu0 0.0
  %426 = vmatpush1.msra.mxu0 0.0
  %427 = vmatprep.subr.mxu0 0.0
  %428 = vmatpush1.msra.mxu0 0.0
  %429 = vmatprep.subr.mxu0 0.0
  %430 = vmatpush1.msra.mxu0 0.0
  %431 = vmatprep.subr.mxu0 0.0
  %432 = vmatpush1.msra.mxu0 0.0
  %433 = vmatprep.subr.mxu0 0.0
  %434 = vmatpush1.msra.mxu0 0.0
  %435 = vmatprep.subr.mxu0 0.0
  %436 = vmatpush1.msra.mxu0 0.0
  %437 = vmatprep.subr.mxu0 0.0
  %438 = vmatpush1.msra.mxu0 0.0
  %439 = vmatprep.subr.mxu0 0.0
  %440 = vmatpush1.msra.mxu0 0.0
  %441 = vmatprep.subr.mxu0 0.0
  %442 = vmatpush1.msra.mxu0 0.0
  %443 = vmatprep.subr.mxu0 0.0
  %444 = vmatpush1.msra.mxu0 0.0
  %445 = vmatprep.subr.mxu0 0.0
  %446 = vmatpush1.msra.mxu0 0.0
  %447 = vmatprep.subr.mxu0 0.0
  %448 = vmatpush1.msra.mxu0 0.0
  %449 = vmatprep.subr.mxu0 0.0
  %450 = vmatpush1.msra.mxu0 0.0
  %451 = vmatprep.subr.mxu0 0.0
  %452 = vmatpush1.msra.mxu0 0.0
  %453 = vmatprep.subr.mxu0 0.0
  %454 = vmatpush1.msra.mxu0 0.0
  %455 = vmatprep.subr.mxu0 0.0
  %456 = vmatpush1.msra.mxu0 0.0
  %457 = vmatprep.mubr.f32.mxu0 0.0
  %458 = vmatmul.mubr.f32.gmra.mrb[0].mxu0 %v388
  %v459 = vpop.f32.mrb[0].mxu0
  %v460 = vadd.f32 0.0, %v459
  %v461 = vpop.f32.mrb[0].mxu0
  %462 = vmatprep.mubr.f32.mxu0 0.0
  %463 = vmatmul.mubr.f32.gmra.mrb[0].mxu0 %v391
  %v464 = vpop.f32.mrb[0].mxu0
  %v465 = vadd.f32 0.0, %v464
  %v466 = vpop.f32.mrb[0].mxu0
  %467 = vdwg.mxu0
  %v468 = vmax.f32 %v460, 0.0
  %v469 = vmax.f32 %v465, 0.0
  %v470 = vld [vmem:[%s1 + $0xf0] sm:$0xff]
  %v471 = vld [vmem:[%s1 + $0xf8] sm:$0xff]
  %v472 = vld [vmem:[%s1 + $0x100] sm:$0xff]
  %v473 = vld [vmem:[%s1 + $0x108] sm:$0xff]
  %v474 = vld [vmem:[%s1 + $0x110] sm:$0xff]
  %v475 = vld [vmem:[%s1 + $0x118] sm:$0xff]
  %v476 = vld [vmem:[%s1 + $0x120] sm:$0xff]
  %v477 = vld [vmem:[%s1 + $0x128] sm:$0xff]
  %v479 = vsel %vm112, %v468, 0
  %v482 = vsel %vm112, %v469, 0
  %484 = vmatprep.subr.mxu0 0.0
  %485 = vmatpush1.msra.mxu0 %v470
  %486 = vmatprep.subr.mxu0 0.0
  %487 = vmatpush1.msra.mxu0 %v471
  %488 = vmatprep.subr.mxu0 0.0
  %489 = vmatpush1.msra.mxu0 %v472
  %490 = vmatprep.subr.mxu0 0.0
  %491 = vmatpush1.msra.mxu0 %v473
  %492 = vmatprep.subr.mxu0 0.0
  %493 = vmatpush1.msra.mxu0 %v474
  %494 = vmatprep.subr.mxu0 0.0
  %495 = vmatpush1.msra.mxu0 %v475
  %496 = vmatprep.subr.mxu0 0.0
  %497 = vmatpush1.msra.mxu0 %v476
  %498 = vmatprep.subr.mxu0 0.0
  %499 = vmatpush1.msra.mxu0 %v477
  %500 = vmatprep.subr.mxu0 0.0
  %501 = vmatpush1.msra.mxu0 0.0
  %502 = vmatprep.subr.mxu0 0.0
  %503 = vmatpush1.msra.mxu0 0.0
  %504 = vmatprep.subr.mxu0 0.0
  %505 = vmatpush1.msra.mxu0 0.0
  %506 = vmatprep.subr.mxu0 0.0
  %507 = vmatpush1.msra.mxu0 0.0
  %508 = vmatprep.subr.mxu0 0.0
  %509 = vmatpush1.msra.mxu0 0.0
  %510 = vmatprep.subr.mxu0 0.0
  %511 = vmatpush1.msra.mxu0 0.0
  %512 = vmatprep.subr.mxu0 0.0
  %513 = vmatpush1.msra.mxu0 0.0
  %514 = vmatprep.subr.mxu0 0.0
  %515 = vmatpush1.msra.mxu0 0.0
  %516 = vmatprep.subr.mxu0 0.0
  %517 = vmatpush1.msra.mxu0 0.0
  %518 = vmatprep.subr.mxu0 0.0
  %519 = vmatpush1.msra.mxu0 0.0
  %520 = vmatprep.subr.mxu0 0.0
  %521 = vmatpush1.msra.mxu0 0.0
  %522 = vmatprep.subr.mxu0 0.0
  %523 = vmatpush1.msra.mxu0 0.0
  %524 = vmatprep.subr.mxu0 0.0
  %525 = vmatpush1.msra.mxu0 0.0
  %526 = vmatprep.subr.mxu0 0.0
  %527 = vmatpush1.msra.mxu0 0.0
  %528 = vmatprep.subr.mxu0 0.0
  %529 = vmatpush1.msra.mxu0 0.0
  %530 = vmatprep.subr.mxu0 0.0
  %531 = vmatpush1.msra.mxu0 0.0
  %532 = vmatprep.subr.mxu0 0.0
  %533 = vmatpush1.msra.mxu0 0.0
  %534 = vmatprep.subr.mxu0 0.0
  %535 = vmatpush1.msra.mxu0 0.0
  %536 = vmatprep.subr.mxu0 0.0
  %537 = vmatpush1.msra.mxu0 0.0
  %538 = vmatprep.subr.mxu0 0.0
  %539 = vmatpush1.msra.mxu0 0.0
  %540 = vmatprep.subr.mxu0 0.0
  %541 = vmatpush1.msra.mxu0 0.0
  %542 = vmatprep.subr.mxu0 0.0
  %543 = vmatpush1.msra.mxu0 0.0
  %544 = vmatprep.subr.mxu0 0.0
  %545 = vmatpush1.msra.mxu0 0.0
  %546 = vmatprep.subr.mxu0 0.0
  %547 = vmatpush1.msra.mxu0 0.0
  %548 = vmatprep.mubr.f32.mxu0 0.0
  %549 = vmatmul.mubr.f32.gmra.mrb[0].mxu0 %v479
  %v550 = vpop.f32.mrb[0].mxu0
  %v551 = vadd.f32 0.0, %v550
  %v552 = vpop.f32.mrb[0].mxu0
  %553 = vmatprep.mubr.f32.mxu0 0.0
  %554 = vmatmul.mubr.f32.gmra.mrb[0].mxu0 %v482
  %v555 = vpop.f32.mrb[0].mxu0
  %v556 = vadd.f32 0.0, %v555
  %v557 = vpop.f32.mrb[0].mxu0
  %558 = vdwg.mxu0
  %v559 = vadd.f32 %v277, %v551
  %v560 = vadd.f32 %v282, %v556
  %563 = vrot.lane.b32.xlu0 %v559, 113
  %v564 = vpop.permute.xlu0 %563
  %565 = vrot.lane.b32.xlu0 %v560, 113
  %v566 = vpop.permute.xlu0 %565
  %v569 = vadd.f32 %v559, %v564
  %v570 = vadd.f32 %v560, %v566
  %vm571 = vcmask 121856
  %v572 = vsel %vm571, %v569, 0.0
  %573 = vadd.xlane.f32.xlu0 %v572
  %v574 = vpop.xlane.xlu0 %573
  %vm575 = vcmask 114688
  %v576 = vsel %vm575, %v570, 0.0
  %577 = vadd.xlane.f32.xlu0 %v576
  %v578 = vpop.xlane.xlu0 %577
  %v579 = vrcp.pop 15.0
  %v580 = vmul.f32 %v574, %v579
  %v581 = vmul.f32 %v578, %v579
  %v582 = vsub.f32 %v569, %v580
  %v583 = vsub.f32 %v570, %v581
  %v584 = vmul.f32 %v582, %v582
  %v585 = vmul.f32 %v583, %v583
  %v586 = vsel %vm571, %v584, 0.0
  %587 = vadd.xlane.f32.xlu0 %v586
  %v588 = vpop.xlane.xlu0 %587
  %v589 = vsel %vm575, %v585, 0.0
  %590 = vadd.xlane.f32.xlu0 %v589
  %v591 = vpop.xlane.xlu0 %590
  %v592 = vmul.f32 %v588, %v579
  %v593 = vmul.f32 %v591, %v579
  %v594 = vadd.f32 %v592, 1e-06
  %v595 = vadd.f32 %v593, 1e-06
  %v596 = vrsqrt.pop %v594
  %v597 = vrsqrt.pop %v595
  %v598 = vmul.f32 %v582, %v596
  %v599 = vmul.f32 %v583, %v597
  %v600 = vld [vmem:[%s1 + $0x130] sm:$0xff]
  %v601 = vld [vmem:[%s1 + $0x138] sm:$0x1]
  %v602 = vmul.f32 %v598, %v600
  %v603 = vmul.f32 %v599, %v601
  %v604 = vld [vmem:[%s1 + $0x140] sm:$0xff]
  %v605 = vld [vmem:[%s1 + $0x148] sm:$0x1]
  %v606 = vadd.f32 %v602, %v604
  %v607 = vadd.f32 %v603, %v605
  %v608 = vld [vmem:[%s1 + $0x150] sm:$0xff]
  %v609 = vld [vmem:[%s1 + $0x158] sm:$0x7f]
  %vm610 = vcmask 72704
  %v612 = vsel %vm610, %v608, 0
  %v615 = vsel %vm610, %v609, 0
  %vm617 = vcmask 1040384
  %v619 = vsel %vm617, %v607, 0
  %621 = vmatprep.subr.mxu0 0.0
  %622 = vmatpush1.msra.mxu0 %v606
  %623 = vmatprep.subr.mxu0 0.0
  %624 = vmatpush1.msra.mxu0 %v619
  %625 = vmatprep.subr.mxu0 0.0
  %626 = vmatpush1.msra.mxu0 0.0
  %627 = vmatprep.subr.mxu0 0.0
  %628 = vmatpush1.msra.mxu0 0.0
  %629 = vmatprep.subr.mxu0 0.0
  %630 = vmatpush1.msra.mxu0 0.0
  %631 = vmatprep.subr.mxu0 0.0
  %632 = vmatpush1.msra.mxu0 0.0
  %633 = vmatprep.subr.mxu0 0.0
  %634 = vmatpush1.msra.mxu0 0.0
  %635 = vmatprep.subr.mxu0 0.0
  %636 = vmatpush1.msra.mxu0 0.0
  %637 = vmatprep.subr.mxu0 0.0
  %638 = vmatpush1.msra.mxu0 0.0
  %639 = vmatprep.subr.mxu0 0.0
  %640 = vmatpush1.msra.mxu0 0.0
  %641 = vmatprep.subr.mxu0 0.0
  %642 = vmatpush1.msra.mxu0 0.0
  %643 = vmatprep.subr.mxu0 0.0
  %644 = vmatpush1.msra.mxu0 0.0
  %645 = vmatprep.subr.mxu0 0.0
  %646 = vmatpush1.msra.mxu0 0.0
  %647 = vmatprep.subr.mxu0 0.0
  %648 = vmatpush1.msra.mxu0 0.0
  %649 = vmatprep.subr.mxu0 0.0
  %650 = vmatpush1.msra.mxu0 0.0
  %651 = vmatprep.subr.mxu0 0.0
  %652 = vmatpush1.msra.mxu0 0.0
  %653 = vmatprep.subr.mxu0 0.0
  %654 = vmatpush1.msra.mxu0 0.0
  %655 = vmatprep.subr.mxu0 0.0
  %656 = vmatpush1.msra.mxu0 0.0
  %657 = vmatprep.subr.mxu0 0.0
  %658 = vmatpush1.msra.mxu0 0.0
  %659 = vmatprep.subr.mxu0 0.0
  %660 = vmatpush1.msra.mxu0 0.0
  %661 = vmatprep.subr.mxu0 0.0
  %662 = vmatpush1.msra.mxu0 0.0
  %663 = vmatprep.subr.mxu0 0.0
  %664 = vmatpush1.msra.mxu0 0.0
  %665 = vmatprep.subr.mxu0 0.0
  %666 = vmatpush1.msra.mxu0 0.0
  %667 = vmatprep.subr.mxu0 0.0
  %668 = vmatpush1.msra.mxu0 0.0
  %669 = vmatprep.subr.mxu0 0.0
  %670 = vmatpush1.msra.mxu0 0.0
  %671 = vmatprep.subr.mxu0 0.0
  %672 = vmatpush1.msra.mxu0 0.0
  %673 = vmatprep.subr.mxu0 0.0
  %674 = vmatpush1.msra.mxu0 0.0
  %675 = vmatprep.subr.mxu0 0.0
  %676 = vmatpush1.msra.mxu0 0.0
  %677 = vmatprep.subr.mxu0 0.0
  %678 = vmatpush1.msra.mxu0 0.0
  %679 = vmatprep.subr.mxu0 0.0
  %680 = vmatpush1.msra.mxu0 0.0
  %681 = vmatprep.subr.mxu0 0.0
  %682 = vmatpush1.msra.mxu0 0.0
  %683 = vmatprep.subr.mxu0 0.0
  %684 = vmatpush1.msra.mxu0 0.0
  %685 = vmatprep.mubr.f32.mxu0 0.0
  %686 = vmatmul.mubr.f32.gmra.mrb[0].mxu0 %v612
  %v687 = vpop.f32.mrb[0].mxu0
  %v688 = vadd.f32 0.0, %v687
  %v689 = vpop.f32.mrb[0].mxu0
  %690 = vmatprep.mubr.f32.mxu0 0.0
  %691 = vmatmul.mubr.f32.gmra.mrb[0].mxu0 %v615
  %v692 = vpop.f32.mrb[0].mxu0
  %v693 = vadd.f32 0.0, %v692
  %v694 = vpop.f32.mrb[0].mxu0
  %695 = vdwg.mxu0
  %v696 = vmax.f32 %v688, 0.0
  %v697 = vmax.f32 %v693, 0.0
  %v698 = vld [vmem:[%s2] sm:$0xff]
  %v699 = vld [vmem:[%s2 + $0x8] sm:$0xff]
  %v700 = vld [vmem:[%s2 + $0x10] sm:$0x7f]
  %v701 = vld [vmem:[%s2 + $0x18] sm:$0x7f]
  %v703 = vsel %vm571, %v696, 0
  %v706 = vsel %vm571, %v697, 0
  %vm708 = vcmask 1046528
  %v710 = vsel %vm708, %v700, 0
  %v713 = vsel %vm708, %v701, 0
  %715 = vmatprep.subr.mxu0 %v699
  %716 = vmatpush1.msra.mxu0 %v698
  %717 = vmatprep.subr.mxu0 %v713
  %718 = vmatpush1.msra.mxu0 %v710
  %719 = vmatprep.subr.mxu0 0.0
  %720 = vmatpush1.msra.mxu0 0.0
  %721 = vmatprep.subr.mxu0 0.0
  %722 = vmatpush1.msra.mxu0 0.0
  %723 = vmatprep.subr.mxu0 0.0
  %724 = vmatpush1.msra.mxu0 0.0
  %725 = vmatprep.subr.mxu0 0.0
  %726 = vmatpush1.msra.mxu0 0.0
  %727 = vmatprep.subr.mxu0 0.0
  %728 = vmatpush1.msra.mxu0 0.0
  %729 = vmatprep.subr.mxu0 0.0
  %730 = vmatpush1.msra.mxu0 0.0
  %731 = vmatprep.subr.mxu0 0.0
  %732 = vmatpush1.msra.mxu0 0.0
  %733 = vmatprep.subr.mxu0 0.0
  %734 = vmatpush1.msra.mxu0 0.0
  %735 = vmatprep.subr.mxu0 0.0
  %736 = vmatpush1.msra.mxu0 0.0
  %737 = vmatprep.subr.mxu0 0.0
  %738 = vmatpush1.msra.mxu0 0.0
  %739 = vmatprep.subr.mxu0 0.0
  %740 = vmatpush1.msra.mxu0 0.0
  %741 = vmatprep.subr.mxu0 0.0
  %742 = vmatpush1.msra.mxu0 0.0
  %743 = vmatprep.subr.mxu0 0.0
  %744 = vmatpush1.msra.mxu0 0.0
  %745 = vmatprep.subr.mxu0 0.0
  %746 = vmatpush1.msra.mxu0 0.0
  %747 = vmatprep.subr.mxu0 0.0
  %748 = vmatpush1.msra.mxu0 0.0
  %749 = vmatprep.subr.mxu0 0.0
  %750 = vmatpush1.msra.mxu0 0.0
  %751 = vmatprep.subr.mxu0 0.0
  %752 = vmatpush1.msra.mxu0 0.0
  %753 = vmatprep.subr.mxu0 0.0
  %754 = vmatpush1.msra.mxu0 0.0
  %755 = vmatprep.subr.mxu0 0.0
  %756 = vmatpush1.msra.mxu0 0.0
  %757 = vmatprep.subr.mxu0 0.0
  %758 = vmatpush1.msra.mxu0 0.0
  %759 = vmatprep.subr.mxu0 0.0
  %760 = vmatpush1.msra.mxu0 0.0
  %761 = vmatprep.subr.mxu0 0.0
  %762 = vmatpush1.msra.mxu0 0.0
  %763 = vmatprep.subr.mxu0 0.0
  %764 = vmatpush1.msra.mxu0 0.0
  %765 = vmatprep.subr.mxu0 0.0
  %766 = vmatpush1.msra.mxu0 0.0
  %767 = vmatprep.subr.mxu0 0.0
  %768 = vmatpush1.msra.mxu0 0.0
  %769 = vmatprep.subr.mxu0 0.0
  %770 = vmatpush1.msra.mxu0 0.0
  %771 = vmatprep.subr.mxu0 0.0
  %772 = vmatpush1.msra.mxu0 0.0
  %773 = vmatprep.subr.mxu0 0.0
  %774 = vmatpush1.msra.mxu0 0.0
  %775 = vmatprep.subr.mxu0 0.0
  %776 = vmatpush1.msra.mxu0 0.0
  %777 = vmatprep.subr.mxu0 0.0
  %778 = vmatpush1.msra.mxu0 0.0
  %779 = vmatprep.mubr.f32.mxu0 0.0
  %780 = vmatmul.mubr.f32.gmra.mrb[0].mxu0 %v703
  %v781 = vpop.f32.mrb[0].mxu0
  %v782 = vadd.f32 0.0, %v781
  %v783 = vpop.f32.mrb[0].mxu0
  %v784 = vadd.f32 0.0, %v783
  %785 = vmatprep.mubr.f32.mxu0 0.0
  %786 = vmatmul.mubr.f32.gmra.mrb[0].mxu0 %v706
  %v787 = vpop.f32.mrb[0].mxu0
  %v788 = vadd.f32 0.0, %v787
  %v789 = vpop.f32.mrb[0].mxu0
  %v790 = vadd.f32 0.0, %v789
  %791 = vdwg.mxu0
  %v792 = vmax.f32 %v782, 0.0
  %v793 = vmax.f32 %v784, 0.0
  %v794 = vmax.f32 %v788, 0.0
  %v795 = vmax.f32 %v790, 0.0
  %v796 = vld [vmem:[%s2 + $0x20] sm:$0xff]
  %v797 = vld [vmem:[%s2 + $0x30] sm:$0xff]
  %v798 = vld [vmem:[%s2 + $0x40] sm:$0xff]
  %v799 = vld [vmem:[%s2 + $0x50] sm:$0xff]
  %v800 = vld [vmem:[%s2 + $0x60] sm:$0xff]
  %v801 = vld [vmem:[%s2 + $0x70] sm:$0xff]
  %v802 = vld [vmem:[%s2 + $0x80] sm:$0xff]
  %v803 = vld [vmem:[%s2 + $0x90] sm:$0xff]
  %v804 = vld [vmem:[%s2 + $0xa0] sm:$0xff]
  %v805 = vld [vmem:[%s2 + $0xb0] sm:$0xff]
  %v806 = vld [vmem:[%s2 + $0xc0] sm:$0xff]
  %v807 = vld [vmem:[%s2 + $0xd0] sm:$0xff]
  %v808 = vld [vmem:[%s2 + $0xe0] sm:$0xff]
  %v809 = vld [vmem:[%s2 + $0xf0] sm:$0xff]
  %v810 = vld [vmem:[%s2 + $0x100] sm:$0xff]
  %v811 = vld [vmem:[%s2 + $0x110] sm:$0xff]
  %v812 = vld [vmem:[%s2 + $0x120] sm:$0xff]
  %v813 = vld [vmem:[%s2 + $0x130] sm:$0xff]
  %v814 = vld [vmem:[%s2 + $0x140] sm:$0xff]
  %v815 = vld [vmem:[%s2 + $0x150] sm:$0xff]
  %v816 = vld [vmem:[%s2 + $0x160] sm:$0xff]
  %v817 = vld [vmem:[%s2 + $0x170] sm:$0xff]
  %v818 = vld [vmem:[%s2 + $0x180] sm:$0xff]
  %v819 = vld [vmem:[%s2 + $0x190] sm:$0xff]
  %v821 = vsel %vm112, %v793, 0
  %v824 = vsel %vm112, %v795, 0
  %826 = vmatprep.subr.mxu0 0.0
  %827 = vmatpush1.msra.mxu0 %v796
  %828 = vmatprep.subr.mxu0 0.0
  %829 = vmatpush1.msra.mxu0 %v797
  %830 = vmatprep.subr.mxu0 0.0
  %831 = vmatpush1.msra.mxu0 %v798
  %832 = vmatprep.subr.mxu0 0.0
  %833 = vmatpush1.msra.mxu0 %v799
  %834 = vmatprep.subr.mxu0 0.0
  %835 = vmatpush1.msra.mxu0 %v800
  %836 = vmatprep.subr.mxu0 0.0
  %837 = vmatpush1.msra.mxu0 %v801
  %838 = vmatprep.subr.mxu0 0.0
  %839 = vmatpush1.msra.mxu0 %v802
  %840 = vmatprep.subr.mxu0 0.0
  %841 = vmatpush1.msra.mxu0 %v803
  %842 = vmatprep.subr.mxu0 0.0
  %843 = vmatpush1.msra.mxu0 %v804
  %844 = vmatprep.subr.mxu0 0.0
  %845 = vmatpush1.msra.mxu0 %v805
  %846 = vmatprep.subr.mxu0 0.0
  %847 = vmatpush1.msra.mxu0 %v806
  %848 = vmatprep.subr.mxu0 0.0
  %849 = vmatpush1.msra.mxu0 %v807
  %850 = vmatprep.subr.mxu0 0.0
  %851 = vmatpush1.msra.mxu0 %v808
  %852 = vmatprep.subr.mxu0 0.0
  %853 = vmatpush1.msra.mxu0 %v809
  %854 = vmatprep.subr.mxu0 0.0
  %855 = vmatpush1.msra.mxu0 %v810
  %856 = vmatprep.subr.mxu0 0.0
  %857 = vmatpush1.msra.mxu0 %v811
  %858 = vmatprep.subr.mxu0 0.0
  %859 = vmatpush1.msra.mxu0 %v812
  %860 = vmatprep.subr.mxu0 0.0
  %861 = vmatpush1.msra.mxu0 %v813
  %862 = vmatprep.subr.mxu0 0.0
  %863 = vmatpush1.msra.mxu0 %v814
  %864 = vmatprep.subr.mxu0 0.0
  %865 = vmatpush1.msra.mxu0 %v815
  %866 = vmatprep.subr.mxu0 0.0
  %867 = vmatpush1.msra.mxu0 %v816
  %868 = vmatprep.subr.mxu0 0.0
  %869 = vmatpush1.msra.mxu0 %v817
  %870 = vmatprep.subr.mxu0 0.0
  %871 = vmatpush1.msra.mxu0 %v818
  %872 = vmatprep.subr.mxu0 0.0
  %873 = vmatpush1.msra.mxu0 %v819
  %874 = vmatprep.subr.mxu0 0.0
  %875 = vmatpush1.msra.mxu0 0.0
  %876 = vmatprep.subr.mxu0 0.0
  %877 = vmatpush1.msra.mxu0 0.0
  %878 = vmatprep.subr.mxu0 0.0
  %879 = vmatpush1.msra.mxu0 0.0
  %880 = vmatprep.subr.mxu0 0.0
  %881 = vmatpush1.msra.mxu0 0.0
  %882 = vmatprep.subr.mxu0 0.0
  %883 = vmatpush1.msra.mxu0 0.0
  %884 = vmatprep.subr.mxu0 0.0
  %885 = vmatpush1.msra.mxu0 0.0
  %886 = vmatprep.subr.mxu0 0.0
  %887 = vmatpush1.msra.mxu0 0.0
  %888 = vmatprep.subr.mxu0 0.0
  %889 = vmatpush1.msra.mxu0 0.0
  %890 = vmatprep.mubr.f32.mxu0 %v821
  %891 = vmatmul.mubr.f32.gmra.mrb[0].mxu0 %v792
  %v892 = vpop.f32.mrb[0].mxu0
  %v893 = vadd.f32 0.0, %v892
  %v894 = vpop.f32.mrb[0].mxu0
  %895 = vmatprep.mubr.f32.mxu0 %v824
  %896 = vmatmul.mubr.f32.gmra.mrb[0].mxu0 %v794
  %v897 = vpop.f32.mrb[0].mxu0
  %v898 = vadd.f32 0.0, %v897
  %v899 = vpop.f32.mrb[0].mxu0
  %900 = vdwg.mxu0
  %v901 = vlaneseq
  %v902 = vshrl.u32 %v901, 7
  %v903 = vsub.s32 3, %v902
  %v904 = vrot.slane %v893, %v903
  %906 = vrot.lane.b32.xlu0 %v904, 30
  %v907 = vpop.permute.xlu0 %906
  %v909 = vmul.f32 %v898, %v907
  %911 = vrot.lane.b32.xlu0 %v909, 68
  %v912 = vpop.permute.xlu0 %911
  %vm914 = vcmask 117761
  %v915 = vsel %vm914, %v912, 0.0
  %916 = vadd.xlane.f32.xlu0 %v915
  %v917 = vpop.xlane.xlu0 %916
  %v918 = vlaneseq
  %v919 = vshrl.u32 %v918, 7
  %v920 = vsub.s32 0, %v919
  %v921 = vrot.slane %v893, %v920
  %v922 = vmul.f32 %v917, %v921
  %v923 = vlaneseq
  %v924 = vshrl.u32 %v923, 7
  %v925 = vsub.s32 4, %v924
  %v926 = vrot.slane %v893, %v925
  %928 = vrot.lane.b32.xlu0 %v926, 30
  %v929 = vpop.permute.xlu0 %928
  %v931 = vmul.f32 %v898, %v929
  %933 = vrot.lane.b32.xlu0 %v931, 68
  %v934 = vpop.permute.xlu0 %933
  %v936 = vsel %vm914, %v934, 0.0
  %937 = vadd.xlane.f32.xlu0 %v936
  %v938 = vpop.xlane.xlu0 %937
  %v939 = vlaneseq
  %v940 = vshrl.u32 %v939, 7
  %v941 = vsub.s32 1, %v940
  %v942 = vrot.slane %v893, %v941
  %v943 = vmul.f32 %v938, %v942
  %v944 = vadd.f32 %v922, %v943
  %v945 = vlaneseq
  %v946 = vshrl.u32 %v945, 7
  %v947 = vsub.s32 5, %v946
  %v948 = vrot.slane %v893, %v947
  %950 = vrot.lane.b32.xlu0 %v948, 30
  %v951 = vpop.permute.xlu0 %950
  %v953 = vmul.f32 %v898, %v951
  %955 = vrot.lane.b32.xlu0 %v953, 68
  %v956 = vpop.permute.xlu0 %955
  %v958 = vsel %vm914, %v956, 0.0
  %959 = vadd.xlane.f32.xlu0 %v958
  %v960 = vpop.xlane.xlu0 %959
  %v961 = vlaneseq
  %v962 = vshrl.u32 %v961, 7
  %v963 = vsub.s32 2, %v962
  %v964 = vrot.slane %v893, %v963
  %v965 = vmul.f32 %v960, %v964
  %v966 = vadd.f32 %v944, %v965
  %v967 = vlaneseq
  %v968 = vshrl.u32 %v967, 7
  %v969 = vsub.s32 6, %v968
  %v970 = vrot.slane %v893, %v969
  %972 = vrot.lane.b32.xlu0 %v970, 30
  %v973 = vpop.permute.xlu0 %972
  %v975 = vmul.f32 %v898, %v973
  %977 = vrot.lane.b32.xlu0 %v975, 68
  %v978 = vpop.permute.xlu0 %977
  %vm980 = vcmask 120836
  %v981 = vsel %vm980, %v978, 0.0
  %982 = vadd.xlane.f32.xlu0 %v981
  %v983 = vpop.xlane.xlu0 %982
  %v984 = vmul.f32 %v983, %v921
  %v985 = vlaneseq
  %v986 = vshrl.u32 %v985, 7
  %v987 = vsub.s32 7, %v986
  %v988 = vrot.slane %v893, %v987
  %990 = vrot.lane.b32.xlu0 %v988, 30
  %v991 = vpop.permute.xlu0 %990
  %v993 = vmul.f32 %v898, %v991
  %995 = vrot.lane.b32.xlu0 %v993, 68
  %v996 = vpop.permute.xlu0 %995
  %v998 = vsel %vm980, %v996, 0.0
  %999 = vadd.xlane.f32.xlu0 %v998
  %v1000 = vpop.xlane.xlu0 %999
  %v1001 = vmul.f32 %v1000, %v942
  %v1002 = vadd.f32 %v984, %v1001
  %v1003 = vlaneseq
  %v1004 = vshrl.u32 %v1003, 7
  %v1005 = vsub.s32 0, %v1004
  %v1006 = vrot.slane %v898, %v1005
  %1008 = vrot.lane.b32.xlu0 %v1006, 30
  %v1009 = vpop.permute.xlu0 %1008
  %v1011 = vmul.f32 %v898, %v1009
  %1013 = vrot.lane.b32.xlu0 %v1011, 68
  %v1014 = vpop.permute.xlu0 %1013
  %v1016 = vsel %vm980, %v1014, 0.0
  %1017 = vadd.xlane.f32.xlu0 %v1016
  %v1018 = vpop.xlane.xlu0 %1017
  %v1019 = vmul.f32 %v1018, %v964
  %v1020 = vadd.f32 %v1002, %v1019
  %v1022 = vrot.slane %v1020, 3
  %1023 = vrot.lane.b32.xlu0 %v1022, 15
  %v1024 = vpop.permute.xlu0 %1023
  %v1026 = vsel %vm571, %v966, %v1024
  %1027 = vrot.lane.b32.xlu0 %v909, 53
  %v1028 = vpop.permute.xlu0 %1027
  %v1030 = vsel %vm914, %v1028, 0.0
  %1031 = vadd.xlane.f32.xlu0 %v1030
  %v1032 = vpop.xlane.xlu0 %1031
  %v1033 = vmul.f32 %v1032, %v921
  %1034 = vrot.lane.b32.xlu0 %v931, 53
  %v1035 = vpop.permute.xlu0 %1034
  %v1037 = vsel %vm914, %v1035, 0.0
  %1038 = vadd.xlane.f32.xlu0 %v1037
  %v1039 = vpop.xlane.xlu0 %1038
  %v1040 = vmul.f32 %v1039, %v942
  %v1041 = vadd.f32 %v1033, %v1040
  %1042 = vrot.lane.b32.xlu0 %v953, 53
  %v1043 = vpop.permute.xlu0 %1042
  %v1045 = vsel %vm914, %v1043, 0.0
  %1046 = vadd.xlane.f32.xlu0 %v1045
  %v1047 = vpop.xlane.xlu0 %1046
  %v1048 = vmul.f32 %v1047, %v964
  %v1049 = vadd.f32 %v1041, %v1048
  %1050 = vrot.lane.b32.xlu0 %v975, 53
  %v1051 = vpop.permute.xlu0 %1050
  %v1053 = vsel %vm980, %v1051, 0.0
  %1054 = vadd.xlane.f32.xlu0 %v1053
  %v1055 = vpop.xlane.xlu0 %1054
  %v1056 = vmul.f32 %v1055, %v921
  %1057 = vrot.lane.b32.xlu0 %v993, 53
  %v1058 = vpop.permute.xlu0 %1057
  %v1060 = vsel %vm980, %v1058, 0.0
  %1061 = vadd.xlane.f32.xlu0 %v1060
  %v1062 = vpop.xlane.xlu0 %1061
  %v1063 = vmul.f32 %v1062, %v942
  %v1064 = vadd.f32 %v1056, %v1063
  %1065 = vrot.lane.b32.xlu0 %v1011, 53
  %v1066 = vpop.permute.xlu0 %1065
  %v1068 = vsel %vm980, %v1066, 0.0
  %1069 = vadd.xlane.f32.xlu0 %v1068
  %v1070 = vpop.xlane.xlu0 %1069
  %v1071 = vmul.f32 %v1070, %v964
  %v1072 = vadd.f32 %v1064, %v1071
  %1074 = vrot.lane.b32.xlu0 %v1049, 113
  %v1075 = vpop.permute.xlu0 %1074
  %v1078 = vrot.slane %v1072, 3
  %v1080 = vsel %vm571, %v1075, %v1078
  %v1082 = vrot.slane %v1026, 1
  %v1085 = vrot.slane %v1080, 6
  %vm1087 = vcmask 1042432
  %v1088 = vsel %vm1087, %v1082, %v1085
  %v1089 = vld [vmem:[%s1 + $0x160] sm:$0xff]
  %v1090 = vld [vmem:[%s1 + $0x168] sm:$0xff]
  %v1091 = vld [vmem:[%s1 + $0x170] sm:$0xff]
  %v1092 = vld [vmem:[%s1 + $0x178] sm:$0xff]
  %v1093 = vtanh.pop %v1088
  %vm1094 = vcmask 48128
  %v1096 = vsel %vm1094, %v1089, 0
  %v1099 = vsel %vm1094, %v1090, 0
  %v1102 = vsel %vm1094, %v1091, 0
  %v1105 = vsel %vm1094, %v1092, 0
  %v1108 = vsel %vm298, %v1093, 0
  %1110 = vmatprep.subr.mxu0 0.0
  %1111 = vmatpush1.msra.mxu0 %v1108
  %1112 = vmatprep.subr.mxu0 0.0
  %1113 = vmatpush1.msra.mxu0 0.0
  %1114 = vmatprep.subr.mxu0 0.0
  %1115 = vmatpush1.msra.mxu0 0.0
  %1116 = vmatprep.subr.mxu0 0.0
  %1117 = vmatpush1.msra.mxu0 0.0
  %1118 = vmatprep.subr.mxu0 0.0
  %1119 = vmatpush1.msra.mxu0 0.0
  %1120 = vmatprep.subr.mxu0 0.0
  %1121 = vmatpush1.msra.mxu0 0.0
  %1122 = vmatprep.subr.mxu0 0.0
  %1123 = vmatpush1.msra.mxu0 0.0
  %1124 = vmatprep.subr.mxu0 0.0
  %1125 = vmatpush1.msra.mxu0 0.0
  %1126 = vmatprep.subr.mxu0 0.0
  %1127 = vmatpush1.msra.mxu0 0.0
  %1128 = vmatprep.subr.mxu0 0.0
  %1129 = vmatpush1.msra.mxu0 0.0
  %1130 = vmatprep.subr.mxu0 0.0
  %1131 = vmatpush1.msra.mxu0 0.0
  %1132 = vmatprep.subr.mxu0 0.0
  %1133 = vmatpush1.msra.mxu0 0.0
  %1134 = vmatprep.subr.mxu0 0.0
  %1135 = vmatpush1.msra.mxu0 0.0
  %1136 = vmatprep.subr.mxu0 0.0
  %1137 = vmatpush1.msra.mxu0 0.0
  %1138 = vmatprep.subr.mxu0 0.0
  %1139 = vmatpush1.msra.mxu0 0.0
  %1140 = vmatprep.subr.mxu0 0.0
  %1141 = vmatpush1.msra.mxu0 0.0
  %1142 = vmatprep.subr.mxu0 0.0
  %1143 = vmatpush1.msra.mxu0 0.0
  %1144 = vmatprep.subr.mxu0 0.0
  %1145 = vmatpush1.msra.mxu0 0.0
  %1146 = vmatprep.subr.mxu0 0.0
  %1147 = vmatpush1.msra.mxu0 0.0
  %1148 = vmatprep.subr.mxu0 0.0
  %1149 = vmatpush1.msra.mxu0 0.0
  %1150 = vmatprep.subr.mxu0 0.0
  %1151 = vmatpush1.msra.mxu0 0.0
  %1152 = vmatprep.subr.mxu0 0.0
  %1153 = vmatpush1.msra.mxu0 0.0
  %1154 = vmatprep.subr.mxu0 0.0
  %1155 = vmatpush1.msra.mxu0 0.0
  %1156 = vmatprep.subr.mxu0 0.0
  %1157 = vmatpush1.msra.mxu0 0.0
  %1158 = vmatprep.subr.mxu0 0.0
  %1159 = vmatpush1.msra.mxu0 0.0
  %1160 = vmatprep.subr.mxu0 0.0
  %1161 = vmatpush1.msra.mxu0 0.0
  %1162 = vmatprep.subr.mxu0 0.0
  %1163 = vmatpush1.msra.mxu0 0.0
  %1164 = vmatprep.subr.mxu0 0.0
  %1165 = vmatpush1.msra.mxu0 0.0
  %1166 = vmatprep.subr.mxu0 0.0
  %1167 = vmatpush1.msra.mxu0 0.0
  %1168 = vmatprep.subr.mxu0 0.0
  %1169 = vmatpush1.msra.mxu0 0.0
  %1170 = vmatprep.subr.mxu0 0.0
  %1171 = vmatpush1.msra.mxu0 0.0
  %1172 = vmatprep.subr.mxu0 0.0
  %1173 = vmatpush1.msra.mxu0 0.0
  %1174 = vmatprep.mubr.f32.mxu0 0.0
  %1175 = vmatmul.mubr.f32.gmra.mrb[0].mxu0 %v1096
  %v1176 = vpop.f32.mrb[0].mxu0
  %v1177 = vadd.f32 0.0, %v1176
  %v1178 = vpop.f32.mrb[0].mxu0
  %1179 = vmatprep.mubr.f32.mxu0 0.0
  %1180 = vmatmul.mubr.f32.gmra.mrb[0].mxu0 %v1099
  %v1181 = vpop.f32.mrb[0].mxu0
  %v1182 = vadd.f32 0.0, %v1181
  %v1183 = vpop.f32.mrb[0].mxu0
  %1184 = vmatprep.mubr.f32.mxu0 0.0
  %1185 = vmatmul.mubr.f32.gmra.mrb[0].mxu0 %v1102
  %v1186 = vpop.f32.mrb[0].mxu0
  %v1187 = vadd.f32 0.0, %v1186
  %v1188 = vpop.f32.mrb[0].mxu0
  %1189 = vmatprep.mubr.f32.mxu0 0.0
  %1190 = vmatmul.mubr.f32.gmra.mrb[0].mxu0 %v1105
  %v1191 = vpop.f32.mrb[0].mxu0
  %v1192 = vadd.f32 0.0, %v1191
  %v1193 = vpop.f32.mrb[0].mxu0
  %1194 = vdwg.mxu0
  %v1195 = vmax.f32 %v1177, 0.0
  %v1196 = vmax.f32 %v1182, 0.0
  %v1197 = vmax.f32 %v1187, 0.0
  %v1198 = vmax.f32 %v1192, 0.0
  %v1199 = vld [vmem:[%s1 + $0x180] sm:$0x7]
  %vm1200 = vcmask 261120
  %v1202 = vsel %vm1200, %v1199, 0
  %1204 = vmatprep.subr.mxu0 0.0
  %1205 = vmatpush1.msra.mxu0 %v1195
  %1206 = vmatprep.subr.mxu0 0.0
  %1207 = vmatpush1.msra.mxu0 %v1196
  %1208 = vmatprep.subr.mxu0 0.0
  %1209 = vmatpush1.msra.mxu0 %v1197
  %1210 = vmatprep.subr.mxu0 0.0
  %1211 = vmatpush1.msra.mxu0 %v1198
  %1212 = vmatprep.subr.mxu0 0.0
  %1213 = vmatpush1.msra.mxu0 0.0
  %1214 = vmatprep.subr.mxu0 0.0
  %1215 = vmatpush1.msra.mxu0 0.0
  %1216 = vmatprep.subr.mxu0 0.0
  %1217 = vmatpush1.msra.mxu0 0.0
  %1218 = vmatprep.subr.mxu0 0.0
  %1219 = vmatpush1.msra.mxu0 0.0
  %1220 = vmatprep.subr.mxu0 0.0
  %1221 = vmatpush1.msra.mxu0 0.0
  %1222 = vmatprep.subr.mxu0 0.0
  %1223 = vmatpush1.msra.mxu0 0.0
  %1224 = vmatprep.subr.mxu0 0.0
  %1225 = vmatpush1.msra.mxu0 0.0
  %1226 = vmatprep.subr.mxu0 0.0
  %1227 = vmatpush1.msra.mxu0 0.0
  %1228 = vmatprep.subr.mxu0 0.0
  %1229 = vmatpush1.msra.mxu0 0.0
  %1230 = vmatprep.subr.mxu0 0.0
  %1231 = vmatpush1.msra.mxu0 0.0
  %1232 = vmatprep.subr.mxu0 0.0
  %1233 = vmatpush1.msra.mxu0 0.0
  %1234 = vmatprep.subr.mxu0 0.0
  %1235 = vmatpush1.msra.mxu0 0.0
  %1236 = vmatprep.subr.mxu0 0.0
  %1237 = vmatpush1.msra.mxu0 0.0
  %1238 = vmatprep.subr.mxu0 0.0
  %1239 = vmatpush1.msra.mxu0 0.0
  %1240 = vmatprep.subr.mxu0 0.0
  %1241 = vmatpush1.msra.mxu0 0.0
  %1242 = vmatprep.subr.mxu0 0.0
  %1243 = vmatpush1.msra.mxu0 0.0
  %1244 = vmatprep.subr.mxu0 0.0
  %1245 = vmatpush1.msra.mxu0 0.0
  %1246 = vmatprep.subr.mxu0 0.0
  %1247 = vmatpush1.msra.mxu0 0.0
  %1248 = vmatprep.subr.mxu0 0.0
  %1249 = vmatpush1.msra.mxu0 0.0
  %1250 = vmatprep.subr.mxu0 0.0
  %1251 = vmatpush1.msra.mxu0 0.0
  %1252 = vmatprep.subr.mxu0 0.0
  %1253 = vmatpush1.msra.mxu0 0.0
  %1254 = vmatprep.subr.mxu0 0.0
  %1255 = vmatpush1.msra.mxu0 0.0
  %1256 = vmatprep.subr.mxu0 0.0
  %1257 = vmatpush1.msra.mxu0 0.0
  %1258 = vmatprep.subr.mxu0 0.0
  %1259 = vmatpush1.msra.mxu0 0.0
  %1260 = vmatprep.subr.mxu0 0.0
  %1261 = vmatpush1.msra.mxu0 0.0
  %1262 = vmatprep.subr.mxu0 0.0
  %1263 = vmatpush1.msra.mxu0 0.0
  %1264 = vmatprep.subr.mxu0 0.0
  %1265 = vmatpush1.msra.mxu0 0.0
  %1266 = vmatprep.subr.mxu0 0.0
  %1267 = vmatpush1.msra.mxu0 0.0
  %1268 = vmatprep.mubr.f32.mxu0 0.0
  %1269 = vmatmul.mubr.f32.gmra.mrb[0].mxu0 %v1202
  %v1270 = vpop.f32.mrb[0].mxu0
  %v1271 = vadd.f32 0.0, %v1270
  %v1272 = vpop.f32.mrb[0].mxu0
  %1273 = vdwg.mxu0
  %v1274 = vtanh.pop %v1271
  %v1275 = vld [vmem:[%s1 + $0x188] sm:$0xff]
  %v1276 = vld [vmem:[%s1 + $0x190] sm:$0xff]
  %v1277 = vld [vmem:[%s1 + $0x198] sm:$0xff]
  %v1278 = vld [vmem:[%s1 + $0x1a0] sm:$0x3f]
  %v1280 = vsel %vm291, %v1274, 0
  %v1283 = vsel %vm298, %v1278, 0
  %1285 = vmatprep.subr.mxu0 0.0
  %1286 = vmatpush1.msra.mxu0 %v1275
  %1287 = vmatprep.subr.mxu0 0.0
  %1288 = vmatpush1.msra.mxu0 %v1276
  %1289 = vmatprep.subr.mxu0 0.0
  %1290 = vmatpush1.msra.mxu0 %v1277
  %1291 = vmatprep.subr.mxu0 0.0
  %1292 = vmatpush1.msra.mxu0 %v1283
  %1293 = vmatprep.subr.mxu0 0.0
  %1294 = vmatpush1.msra.mxu0 0.0
  %1295 = vmatprep.subr.mxu0 0.0
  %1296 = vmatpush1.msra.mxu0 0.0
  %1297 = vmatprep.subr.mxu0 0.0
  %1298 = vmatpush1.msra.mxu0 0.0
  %1299 = vmatprep.subr.mxu0 0.0
  %1300 = vmatpush1.msra.mxu0 0.0
  %1301 = vmatprep.subr.mxu0 0.0
  %1302 = vmatpush1.msra.mxu0 0.0
  %1303 = vmatprep.subr.mxu0 0.0
  %1304 = vmatpush1.msra.mxu0 0.0
  %1305 = vmatprep.subr.mxu0 0.0
  %1306 = vmatpush1.msra.mxu0 0.0
  %1307 = vmatprep.subr.mxu0 0.0
  %1308 = vmatpush1.msra.mxu0 0.0
  %1309 = vmatprep.subr.mxu0 0.0
  %1310 = vmatpush1.msra.mxu0 0.0
  %1311 = vmatprep.subr.mxu0 0.0
  %1312 = vmatpush1.msra.mxu0 0.0
  %1313 = vmatprep.subr.mxu0 0.0
  %1314 = vmatpush1.msra.mxu0 0.0
  %1315 = vmatprep.subr.mxu0 0.0
  %1316 = vmatpush1.msra.mxu0 0.0
  %1317 = vmatprep.subr.mxu0 0.0
  %1318 = vmatpush1.msra.mxu0 0.0
  %1319 = vmatprep.subr.mxu0 0.0
  %1320 = vmatpush1.msra.mxu0 0.0
  %1321 = vmatprep.subr.mxu0 0.0
  %1322 = vmatpush1.msra.mxu0 0.0
  %1323 = vmatprep.subr.mxu0 0.0
  %1324 = vmatpush1.msra.mxu0 0.0
  %1325 = vmatprep.subr.mxu0 0.0
  %1326 = vmatpush1.msra.mxu0 0.0
  %1327 = vmatprep.subr.mxu0 0.0
  %1328 = vmatpush1.msra.mxu0 0.0
  %1329 = vmatprep.subr.mxu0 0.0
  %1330 = vmatpush1.msra.mxu0 0.0
  %1331 = vmatprep.subr.mxu0 0.0
  %1332 = vmatpush1.msra.mxu0 0.0
  %1333 = vmatprep.subr.mxu0 0.0
  %1334 = vmatpush1.msra.mxu0 0.0
  %1335 = vmatprep.subr.mxu0 0.0
  %1336 = vmatpush1.msra.mxu0 0.0
  %1337 = vmatprep.subr.mxu0 0.0
  %1338 = vmatpush1.msra.mxu0 0.0
  %1339 = vmatprep.subr.mxu0 0.0
  %1340 = vmatpush1.msra.mxu0 0.0
  %1341 = vmatprep.subr.mxu0 0.0
  %1342 = vmatpush1.msra.mxu0 0.0
  %1343 = vmatprep.subr.mxu0 0.0
  %1344 = vmatpush1.msra.mxu0 0.0
  %1345 = vmatprep.subr.mxu0 0.0
  %1346 = vmatpush1.msra.mxu0 0.0
  %1347 = vmatprep.subr.mxu0 0.0
  %1348 = vmatpush1.msra.mxu0 0.0
  %1349 = vmatprep.mubr.f32.mxu0 0.0
  %1350 = vmatmul.mubr.f32.gmra.mrb[0].mxu0 %v1280
  %v1351 = vpop.f32.mrb[0].mxu0
  %v1352 = vadd.f32 0.0, %v1351
  %v1353 = vpop.f32.mrb[0].mxu0
  %1354 = vdwg.mxu0
  %v1355 = vmax.f32 %v1352, 0.0
  %v1356 = vld [vmem:[%s1 + $0x1a8] sm:$0xff]
  %v1357 = vld [vmem:[%s1 + $0x1b0] sm:$0xff]
  %v1358 = vld [vmem:[%s1 + $0x1b8] sm:$0xff]
  %v1359 = vld [vmem:[%s1 + $0x1c0] sm:$0xff]
  %v1360 = vld [vmem:[%s1 + $0x1c8] sm:$0xff]
  %v1361 = vld [vmem:[%s1 + $0x1d0] sm:$0xff]
  %v1362 = vld [vmem:[%s1 + $0x1d8] sm:$0xff]
  %v1363 = vld [vmem:[%s1 + $0x1e0] sm:$0xff]
  %v1365 = vsel %vm112, %v1355, 0
  %1367 = vmatprep.subr.mxu0 0.0
  %1368 = vmatpush1.msra.mxu0 %v1356
  %1369 = vmatprep.subr.mxu0 0.0
  %1370 = vmatpush1.msra.mxu0 %v1357
  %1371 = vmatprep.subr.mxu0 0.0
  %1372 = vmatpush1.msra.mxu0 %v1358
  %1373 = vmatprep.subr.mxu0 0.0
  %1374 = vmatpush1.msra.mxu0 %v1359
  %1375 = vmatprep.subr.mxu0 0.0
  %1376 = vmatpush1.msra.mxu0 %v1360
  %1377 = vmatprep.subr.mxu0 0.0
  %1378 = vmatpush1.msra.mxu0 %v1361
  %1379 = vmatprep.subr.mxu0 0.0
  %1380 = vmatpush1.msra.mxu0 %v1362
  %1381 = vmatprep.subr.mxu0 0.0
  %1382 = vmatpush1.msra.mxu0 %v1363
  %1383 = vmatprep.subr.mxu0 0.0
  %1384 = vmatpush1.msra.mxu0 0.0
  %1385 = vmatprep.subr.mxu0 0.0
  %1386 = vmatpush1.msra.mxu0 0.0
  %1387 = vmatprep.subr.mxu0 0.0
  %1388 = vmatpush1.msra.mxu0 0.0
  %1389 = vmatprep.subr.mxu0 0.0
  %1390 = vmatpush1.msra.mxu0 0.0
  %1391 = vmatprep.subr.mxu0 0.0
  %1392 = vmatpush1.msra.mxu0 0.0
  %1393 = vmatprep.subr.mxu0 0.0
  %1394 = vmatpush1.msra.mxu0 0.0
  %1395 = vmatprep.subr.mxu0 0.0
  %1396 = vmatpush1.msra.mxu0 0.0
  %1397 = vmatprep.subr.mxu0 0.0
  %1398 = vmatpush1.msra.mxu0 0.0
  %1399 = vmatprep.subr.mxu0 0.0
  %1400 = vmatpush1.msra.mxu0 0.0
  %1401 = vmatprep.subr.mxu0 0.0
  %1402 = vmatpush1.msra.mxu0 0.0
  %1403 = vmatprep.subr.mxu0 0.0
  %1404 = vmatpush1.msra.mxu0 0.0
  %1405 = vmatprep.subr.mxu0 0.0
  %1406 = vmatpush1.msra.mxu0 0.0
  %1407 = vmatprep.subr.mxu0 0.0
  %1408 = vmatpush1.msra.mxu0 0.0
  %1409 = vmatprep.subr.mxu0 0.0
  %1410 = vmatpush1.msra.mxu0 0.0
  %1411 = vmatprep.subr.mxu0 0.0
  %1412 = vmatpush1.msra.mxu0 0.0
  %1413 = vmatprep.subr.mxu0 0.0
  %1414 = vmatpush1.msra.mxu0 0.0
  %1415 = vmatprep.subr.mxu0 0.0
  %1416 = vmatpush1.msra.mxu0 0.0
  %1417 = vmatprep.subr.mxu0 0.0
  %1418 = vmatpush1.msra.mxu0 0.0
  %1419 = vmatprep.subr.mxu0 0.0
  %1420 = vmatpush1.msra.mxu0 0.0
  %1421 = vmatprep.subr.mxu0 0.0
  %1422 = vmatpush1.msra.mxu0 0.0
  %1423 = vmatprep.subr.mxu0 0.0
  %1424 = vmatpush1.msra.mxu0 0.0
  %1425 = vmatprep.subr.mxu0 0.0
  %1426 = vmatpush1.msra.mxu0 0.0
  %1427 = vmatprep.subr.mxu0 0.0
  %1428 = vmatpush1.msra.mxu0 0.0
  %1429 = vmatprep.subr.mxu0 0.0
  %1430 = vmatpush1.msra.mxu0 0.0
  %1431 = vmatprep.mubr.f32.mxu0 0.0
  %1432 = vmatmul.mubr.f32.gmra.mrb[0].mxu0 %v1365
  %v1433 = vpop.f32.mrb[0].mxu0
  %v1434 = vadd.f32 0.0, %v1433
  %v1435 = vpop.f32.mrb[0].mxu0
  %1436 = vdwg.mxu0
  %v1437 = vtanh.pop %v1434
  %v1438 = vld [vmem:[%s1 + $0x1e8] sm:$0xff]
  %v1439 = vld [vmem:[%s1 + $0x1f0] sm:$0xff]
  %v1440 = vld [vmem:[%s1 + $0x1f8] sm:$0xff]
  %v1441 = vld [vmem:[%s1 + $0x200] sm:$0x3f]
  %v1442 = vld [vmem:[%s1 + $0x210] sm:$0x7]
  %1444 = vset.pattern.permute.xlu0 0
  %1445 = vperm.xlu0 %1444, %v1442
  %v1446 = vpop.permute.xlu0 %1445
  %v1449 = vsel %vm291, %v1437, 0
  %v1452 = vsel %vm298, %v1441, 0
  %1454 = vmatprep.subr.mxu0 0.0
  %1455 = vmatpush1.msra.mxu0 %v1438
  %1456 = vmatprep.subr.mxu0 0.0
  %1457 = vmatpush1.msra.mxu0 %v1439
  %1458 = vmatprep.subr.mxu0 0.0
  %1459 = vmatpush1.msra.mxu0 %v1440
  %1460 = vmatprep.subr.mxu0 0.0
  %1461 = vmatpush1.msra.mxu0 %v1452
  %1462 = vmatprep.subr.mxu0 0.0
  %1463 = vmatpush1.msra.mxu0 0.0
  %1464 = vmatprep.subr.mxu0 0.0
  %1465 = vmatpush1.msra.mxu0 0.0
  %1466 = vmatprep.subr.mxu0 0.0
  %1467 = vmatpush1.msra.mxu0 0.0
  %1468 = vmatprep.subr.mxu0 0.0
  %1469 = vmatpush1.msra.mxu0 0.0
  %1470 = vmatprep.subr.mxu0 0.0
  %1471 = vmatpush1.msra.mxu0 0.0
  %1472 = vmatprep.subr.mxu0 0.0
  %1473 = vmatpush1.msra.mxu0 0.0
  %1474 = vmatprep.subr.mxu0 0.0
  %1475 = vmatpush1.msra.mxu0 0.0
  %1476 = vmatprep.subr.mxu0 0.0
  %1477 = vmatpush1.msra.mxu0 0.0
  %1478 = vmatprep.subr.mxu0 0.0
  %1479 = vmatpush1.msra.mxu0 0.0
  %1480 = vmatprep.subr.mxu0 0.0
  %1481 = vmatpush1.msra.mxu0 0.0
  %1482 = vmatprep.subr.mxu0 0.0
  %1483 = vmatpush1.msra.mxu0 0.0
  %1484 = vmatprep.subr.mxu0 0.0
  %1485 = vmatpush1.msra.mxu0 0.0
  %1486 = vmatprep.subr.mxu0 0.0
  %1487 = vmatpush1.msra.mxu0 0.0
  %1488 = vmatprep.subr.mxu0 0.0
  %1489 = vmatpush1.msra.mxu0 0.0
  %1490 = vmatprep.subr.mxu0 0.0
  %1491 = vmatpush1.msra.mxu0 0.0
  %1492 = vmatprep.subr.mxu0 0.0
  %1493 = vmatpush1.msra.mxu0 0.0
  %1494 = vmatprep.subr.mxu0 0.0
  %1495 = vmatpush1.msra.mxu0 0.0
  %1496 = vmatprep.subr.mxu0 0.0
  %1497 = vmatpush1.msra.mxu0 0.0
  %1498 = vmatprep.subr.mxu0 0.0
  %1499 = vmatpush1.msra.mxu0 0.0
  %1500 = vmatprep.subr.mxu0 0.0
  %1501 = vmatpush1.msra.mxu0 0.0
  %1502 = vmatprep.subr.mxu0 0.0
  %1503 = vmatpush1.msra.mxu0 0.0
  %1504 = vmatprep.subr.mxu0 0.0
  %1505 = vmatpush1.msra.mxu0 0.0
  %1506 = vmatprep.subr.mxu0 0.0
  %1507 = vmatpush1.msra.mxu0 0.0
  %1508 = vmatprep.subr.mxu0 0.0
  %1509 = vmatpush1.msra.mxu0 0.0
  %1510 = vmatprep.subr.mxu0 0.0
  %1511 = vmatpush1.msra.mxu0 0.0
  %1512 = vmatprep.subr.mxu0 0.0
  %1513 = vmatpush1.msra.mxu0 0.0
  %1514 = vmatprep.subr.mxu0 0.0
  %1515 = vmatpush1.msra.mxu0 0.0
  %1516 = vmatprep.subr.mxu0 0.0
  %1517 = vmatpush1.msra.mxu0 0.0
  %1518 = vmatprep.mubr.f32.mxu0 0.0
  %1519 = vmatmul.mubr.f32.gmra.mrb[0].mxu0 %v1449
  %v1520 = vpop.f32.mrb[0].mxu0
  %v1521 = vadd.f32 %v1446, %v1520
  %v1522 = vpop.f32.mrb[0].mxu0
  %1523 = vdwg.mxu0
  %v1524 = vld [vmem:[%s1 + $0x208] sm:$0x7]
  %v1525 = vld [vmem:[%s0] sm:$0x7]
  %1527 = vset.pattern.permute.xlu0 0
  %1528 = vperm.xlu0 %1527, %v1525
  %v1529 = vpop.permute.xlu0 %1528
  %1532 = vrot.lane.b32.xlu0 %v1521, 113
  %v1533 = vpop.permute.xlu0 %1532
  %v1535 = vmul.f32 %v1524, %v1533
  %v1536 = vadd.f32 %v1525, %v1535
  %1538 = vset.pattern.permute.xlu0 0
  %1539 = vperm.xlu0 %1538, %v1536
  %v1540 = vpop.permute.xlu0 %1539
  %1543 = vset.pattern.permute.xlu0 0
  %1544 = vperm.xlu0 %1543, %v1524
  %v1545 = vpop.permute.xlu0 %1544
  %v1547 = vmul.f32 %v1521, %v1545
  %v1548 = vsel %vm20, %v1529, %v1540
  %v1549 = vadd.f32 %v1547, %v1548
  %vm1550 = vcmask 256000
  %1551 = vst.msk [vmem:[%s3] sm:$0x7] %vm1550, %v1549
  // Predicated region
  $region14: #{forward.1} parent=0 // pred_check
    _
  $region15: #{forward.1} parent=0 // pred_check_branch
    %1553 = sbr.rel (0) target = $region17
  $region16: #{forward.1} parent=0 // pred_region
    _
  $region17: #{forward.1} parent=0 // pred_fallthru
    _
  // Predicated region
  $region18: #{forward.1} parent=0 // pred_check
    _
  $region19: #{forward.1} parent=0 // pred_check_branch
    %1555 = sbr.rel (0) target = $region21
  $region20: #{forward.1} parent=0 // pred_region
    _
  $region21: #{forward.1} parent=0 // pred_fallthru
    _

</llo_original>
